<compile_context>
chip_gen: v7x
topology: tpu7x:2x2x1
jax: 0.10.0
libtpu: 0.0.40
codegen_flags: <defaults>
</compile_context>

<pallas_src>
import functools

import jax
import jax.numpy as jnp
from jax.experimental import pallas as pl
from jax.experimental.pallas import tpu as pltpu


# ------------------------------ small helpers ------------------------------

def _round_up(n, m):
    return (n + m - 1) // m * m


@functools.lru_cache(maxsize=None)
def _vmem_budget_bytes():
    """Generation-aware scoped-VMEM budget: ~75% of physical VMEM, capped.
    v5e/v6e (128 MiB) -> 96 MiB; v7x (64 MiB) -> 48 MiB; unknown -> 48 MiB."""
    try:
        phys = int(pltpu.get_tpu_info().vmem_capacity_bytes)
    except Exception:
        phys = 64 * 1024 * 1024
    return min(phys * 3 // 4, 96 * 1024 * 1024)


def _divisor_tiles(dim, candidates):
    """Candidates that evenly divide `dim` (largest first); else the full dim
    (a full-extent block is always a legal BlockSpec)."""
    opts = [c for c in candidates if c <= dim and dim % c == 0]
    return opts if opts else [dim]


def _erf(x):
    # Abramowitz & Stegun 7.1.26 rational approximation (|err| < 1.5e-7):
    # exact-GELU quality. exp() lands on the EUP slot; the divide is an EUP
    # approx reciprocal + one Newton step so the epilogue stays off the VALU
    # critical path (matters most on v5e, which has no bf16 VPU).
    a1, a2, a3, a4, a5 = (0.254829592, -0.284496736, 1.421413741,
                          -1.453152027, 1.061405429)
    p = 0.3275911
    sign = jnp.where(x >= 0.0, 1.0, -1.0)
    ax = jnp.abs(x)
    u = 1.0 + p * ax
    t = pl.reciprocal(u, approx=True)
    t = t * (2.0 - u * t)                    # one Newton step -> ~f32 exact
    poly = ((((a5 * t + a4) * t + a3) * t + a2) * t + a1) * t
    return sign * (1.0 - poly * jnp.exp(-ax * ax))


def _gelu_exact(x):
    return 0.5 * x * (1.0 + _erf(x * 0.7071067811865476))


def _softmax_rows(s):
    """Row softmax (f32). The divide acts only on the (rows, 1) denominator
    column (exact, negligible cost) and is broadcast-multiplied back, so row
    sums are exact to f32 precision."""
    m = jnp.max(s, axis=-1, keepdims=True)
    p = jnp.exp(s - m)
    denom = jnp.sum(p, axis=-1, keepdims=True)
    return p * (1.0 / denom)


# --------------------- tiled linear (bias/GELU/residual) --------------------

def _linear_kernel(*refs, activation, has_residual):
    if has_residual:
        x_ref, w_ref, b_ref, r_ref, o_ref, acc_ref = refs
    else:
        x_ref, w_ref, b_ref, o_ref, acc_ref = refs
        r_ref = None
    k = pl.program_id(2)

    @pl.when(k == 0)
    def _():
        acc_ref[...] = jnp.zeros_like(acc_ref)

    acc_ref[...] += jnp.dot(
        x_ref[...].astype(jnp.bfloat16),
        w_ref[...].astype(jnp.bfloat16),
        preferred_element_type=jnp.float32,
    )

    @pl.when(k == pl.num_programs(2) - 1)
    def _():
        y = acc_ref[...] + b_ref[...]
        if activation == "gelu":
            y = _gelu_exact(y)
        if r_ref is not None:
            y = y + r_ref[...].astype(jnp.float32)
        o_ref[...] = y.astype(o_ref.dtype)


def _fit_linear_tiles(M, N, K, x_bytes, out_bytes, res_bytes):
    """Pick the largest (tm, tn, tk) whose double-buffered working set fits the
    generation-aware VMEM budget (512-class tiles on v5e/v6e, smaller on v7x)."""
    budget = _vmem_budget_bytes()
    tk = _divisor_tiles(K, (512, 256, 128))[0]
    tm_opts = _divisor_tiles(M, (512, 256, 128, 64, 32, 16, 8))
    tn_opts = _divisor_tiles(N, (512, 256, 128))
    for tn in tn_opts:
        for tm in tm_opts:
            need = (2 * tm * tk * x_bytes          # x block, double-buffered
                    + 2 * tk * tn * 2              # bf16 weight panel, 2 bufs
                    + 2 * tn * 4                   # bias
                    + 2 * tm * tn * out_bytes      # output block, 2 bufs
                    + 2 * tm * tn * res_bytes      # residual block, 2 bufs
                    + tm * tn * 4)                 # f32 accumulator scratch
            if need <= (budget * 3) // 4:          # headroom for Mosaic scratch
                return tm, tn, tk
    return tm_opts[-1], tn_opts[-1], tk


def linear(x, w, b, *, residual=None, activation=None, out_dtype=jnp.float32):
    """y = act(x @ w + b) [+ residual].  x: (M,K), w: (K,N) bf16, b: (N,)."""
    M, K = x.shape
    _, N = w.shape
    x_bytes = jnp.dtype(x.dtype).itemsize
    out_bytes = jnp.dtype(out_dtype).itemsize
    res_bytes = jnp.dtype(residual.dtype).itemsize if residual is not None else 0
    tm, tn, tk = _fit_linear_tiles(M, N, K, x_bytes, out_bytes, res_bytes)
    grid = (M // tm, N // tn, K // tk)

    in_specs = [
        pl.BlockSpec((tm, tk), lambda i, j, k: (i, k)),
        pl.BlockSpec((tk, tn), lambda i, j, k: (k, j)),
        pl.BlockSpec((1, tn), lambda i, j, k: (0, j)),
    ]
    args = [x, w, b.reshape(1, N)]
    if residual is not None:
        in_specs.append(pl.BlockSpec((tm, tn), lambda i, j, k: (i, j)))
        args.append(residual)

    kern = functools.partial(_linear_kernel, activation=activation,
                             has_residual=residual is not None)
    return pl.pallas_call(
        kern,
        out_shape=jax.ShapeDtypeStruct((M, N), out_dtype),
        grid=grid,
        in_specs=in_specs,
        out_specs=pl.BlockSpec((tm, tn), lambda i, j, k: (i, j)),
        scratch_shapes=[pltpu.VMEM((tm, tn), jnp.float32)],
        compiler_params=pltpu.CompilerParams(
            dimension_semantics=("parallel", "parallel", "arbitrary"),
            vmem_limit_bytes=_vmem_budget_bytes()),
    )(*args)


# -------------------- fused LayerNorm -> linear (+GELU) ---------------------

def _ln_linear_kernel(x_ref, g_ref, beta_ref, w_ref, b_ref, o_ref, xn_ref,
                      *, activation):
    # LayerNorm (and its bf16 cast) is computed ONCE per row block, at the
    # first output-column tile, and cached in the xn VMEM scratch for reuse
    # across the remaining j tiles.
    @pl.when(pl.program_id(1) == 0)
    def _():
        x = x_ref[...].astype(jnp.float32)
        mean = jnp.mean(x, axis=-1, keepdims=True)
        var = jnp.mean(jnp.square(x - mean), axis=-1, keepdims=True)
        xn = (x - mean) * jax.lax.rsqrt(var + 1e-5) * g_ref[...] + beta_ref[...]
        xn_ref[...] = xn.astype(xn_ref.dtype)

    y = jnp.dot(xn_ref[...], w_ref[...].astype(jnp.bfloat16),
                preferred_element_type=jnp.float32) + b_ref[...]
    if activation == "gelu":
        y = _gelu_exact(y)
    o_ref[...] = y.astype(o_ref.dtype)


def _fit_ln_tiles(M, N, K, out_bytes):
    budget = _vmem_budget_bytes()
    tm_opts = _divisor_tiles(M, (512, 256, 128, 64, 32, 16, 8))
    tn_opts = _divisor_tiles(N, (512, 256, 128))
    for tn in tn_opts:
        for tm in tm_opts:
            need = (2 * tm * K * 4                 # f32 x row block, 2 bufs
                    + tm * K * 2                   # bf16 xn scratch
                    + 2 * K * tn * 2               # bf16 weight panel, 2 bufs
                    + 4 * K * 4 + 2 * tn * 4       # gamma / beta / bias
                    + 2 * tm * tn * out_bytes)     # output block, 2 bufs
            if need <= (budget * 3) // 4:
                return tm, tn
    return tm_opts[-1], tn_opts[-1]


def ln_linear(x, gamma, beta, w, b, *, activation=None, out_dtype=jnp.float32):
    """y = act(LayerNorm(x) @ w + b).  LN is a row-block prologue; the
    normalized activation never touches HBM."""
    M, K = x.shape
    _, N = w.shape
    tm, tn = _fit_ln_tiles(M, N, K, jnp.dtype(out_dtype).itemsize)
    grid = (M // tm, N // tn)
    kern = functools.partial(_ln_linear_kernel, activation=activation)
    return pl.pallas_call(
        kern,
        out_shape=jax.ShapeDtypeStruct((M, N), out_dtype),
        grid=grid,
        in_specs=[
            pl.BlockSpec((tm, K), lambda i, j: (i, 0)),
            pl.BlockSpec((1, K), lambda i, j: (0, 0)),
            pl.BlockSpec((1, K), lambda i, j: (0, 0)),
            pl.BlockSpec((K, tn), lambda i, j: (0, j)),
            pl.BlockSpec((1, tn), lambda i, j: (0, j)),
        ],
        out_specs=pl.BlockSpec((tm, tn), lambda i, j: (i, j)),
        scratch_shapes=[pltpu.VMEM((tm, K), jnp.bfloat16)],
        compiler_params=pltpu.CompilerParams(
            # j must be sequential: the xn scratch carries state across j.
            dimension_semantics=("parallel", "arbitrary"),
            vmem_limit_bytes=_vmem_budget_bytes()),
    )(x, gamma.reshape(1, K), beta.reshape(1, K), w, b.reshape(1, N))


# ---------------------- attention (one head per grid step) ------------------

def _mha_kernel(q_ref, k_ref, v_ref, o_ref, *, scale, n_valid):
    q = q_ref[0, 0]                        # (Np, dh) bf16, lane-contiguous
    k = k_ref[0, 0]
    v = v_ref[0, 0]
    s = jax.lax.dot_general(q, k, (((1,), (1,)), ((), ())),
                            preferred_element_type=jnp.float32) * scale
    np_ = s.shape[0]
    if n_valid < np_:                      # mask padded keys (static branch)
        col = jax.lax.broadcasted_iota(jnp.int32, (np_, np_), 1)
        s = jnp.where(col < n_valid, s, -1e30)
    wgt = _softmax_rows(s)
    out = jnp.dot(wgt.astype(jnp.bfloat16), v,
                  preferred_element_type=jnp.float32)
    o_ref[0, 0] = out.astype(o_ref.dtype)  # full-extent block store


def multi_head_attention(q, k, v, scale, n_valid):
    """q/k/v: (B, H, Np, dh) bf16 -> weighted features (B, H, Np, dh) bf16."""
    B, H, Np, dh = q.shape
    kern = functools.partial(_mha_kernel, scale=scale, n_valid=n_valid)
    spec = pl.BlockSpec((1, 1, Np, dh), lambda b, h: (b, h, 0, 0))
    return pl.pallas_call(
        kern,
        out_shape=jax.ShapeDtypeStruct((B, H, Np, dh), jnp.bfloat16),
        grid=(B, H),
        in_specs=[spec, spec, spec],
        out_specs=pl.BlockSpec((1, 1, Np, dh), lambda b, h: (b, h, 0, 0)),
        compiler_params=pltpu.CompilerParams(
            dimension_semantics=("parallel", "parallel"),
            vmem_limit_bytes=_vmem_budget_bytes()),
    )(q, k, v)


def _attn_score_kernel(q_ref, k_ref, o_ref, *, scale, n_valid):
    q = q_ref[0, 0]                        # (Np, dh) bf16
    k = k_ref[0, 0]
    s = jax.lax.dot_general(q, k, (((1,), (1,)), ((), ())),
                            preferred_element_type=jnp.float32) * scale
    np_ = s.shape[0]
    if n_valid < np_:
        col = jax.lax.broadcasted_iota(jnp.int32, (np_, np_), 1)
        s = jnp.where(col < n_valid, s, -1e30)
    o_ref[0, 0] = _softmax_rows(s).astype(o_ref.dtype)


def attention_score(q, k, scale, n_valid):
    """q/k: (B, H, Np, dh) -> softmax(q k^T * scale): (B, H, Np, Np) f32.
    One (Np, Np) panel per grid step keeps the block well under v7x VMEM."""
    B, H, Np, dh = q.shape
    kern = functools.partial(_attn_score_kernel, scale=scale, n_valid=n_valid)
    spec = pl.BlockSpec((1, 1, Np, dh), lambda b, h: (b, h, 0, 0))
    return pl.pallas_call(
        kern,
        out_shape=jax.ShapeDtypeStruct((B, H, Np, Np), jnp.float32),
        grid=(B, H),
        in_specs=[spec, spec],
        out_specs=pl.BlockSpec((1, 1, Np, Np), lambda b, h: (b, h, 0, 0)),
        compiler_params=pltpu.CompilerParams(
            dimension_semantics=("parallel", "parallel"),
            vmem_limit_bytes=_vmem_budget_bytes()),
    )(q, k)


# ------------------------------ model (glue) --------------------------------

def _split_heads(qkv, B, Np, num_heads, dh):
    # (B*Np, 3D) -> q, k, v each (B, H, Np, dh): head-major, lane-contiguous
    # per-head tiles for the attention kernels (wrapper-side layout plumbing).
    qkv5 = qkv.reshape(B, Np, 3, num_heads, dh).transpose(2, 0, 3, 1, 4)
    return qkv5[0], qkv5[1], qkv5[2]


def _attention_block(xf, blk, B, Np, D, num_heads, dh, scale, n_valid):
    # LN1 fused into qkv; residual add fused into the proj linear epilogue.
    qkv = ln_linear(xf, blk["ln1_g"], blk["ln1_b"], blk["qkv_w"], blk["qkv_b"],
                    out_dtype=jnp.bfloat16)                      # (M, 3D)
    q, k, v = _split_heads(qkv, B, Np, num_heads, dh)
    attn = multi_head_attention(q, k, v, scale, n_valid)         # (B,H,Np,dh)
    attn = attn.transpose(0, 2, 1, 3).reshape(B * Np, D)         # merge heads
    return linear(attn, blk["proj_w"], blk["proj_b"], residual=xf,
                  out_dtype=jnp.float32)


def _mlp_block(xf, blk):
    # LN2 + fc1 + exact GELU in one kernel; residual fused into fc2 epilogue.
    h1 = ln_linear(xf, blk["ln2_g"], blk["ln2_b"], blk["fc1_w"], blk["fc1_b"],
                   activation="gelu", out_dtype=jnp.bfloat16)
    return linear(h1, blk["fc2_w"], blk["fc2_b"], residual=xf,
                  out_dtype=jnp.float32)


def vit_attention_score_forward(params, x, cfg):
    """x: (B, C, H, W) f32 (NCHW) -> attention weights (B, heads, N, N)."""
    B, C, H, W = x.shape
    ph, pw = cfg["patch_size"]
    D = cfg["feature_dim"]
    num_heads = cfg["num_heads"]
    dh = D // num_heads
    scale = dh ** (-0.5)
    gh, gw = H // ph, W // pw
    num_patches = gh * gw
    N = num_patches + 1                     # patches + cls token
    Np = _round_up(N, 8)                    # sublane-friendly padded length

    # --- Embedding: strided conv == patch extraction (glue) + Pallas matmul ---
    patches = (x.reshape(B, C, gh, ph, gw, pw)
                 .transpose(0, 2, 4, 1, 3, 5)
                 .reshape(B * num_patches, C * ph * pw))
    emb = linear(patches, params["patch_w"], params["patch_b"],
                 out_dtype=jnp.float32).reshape(B, num_patches, D)

    cls = jnp.broadcast_to(params["cls_token"], (B, 1, D))
    seq = jnp.concatenate([cls, emb], axis=1) + params["pos_embedding"][:, :N]
    seq = jnp.pad(seq, ((0, 0), (0, Np - N), (0, 0)))  # padded keys masked later
    xf = seq.reshape(B * Np, D)                         # f32 residual stream

    # --- Transformer: depth - 1 pre-LN blocks ---
    for blk in params["blocks"]:
        xf = _attention_block(xf, blk, B, Np, D, num_heads, dh, scale, N)
        xf = _mlp_block(xf, blk)

    # --- AttentionScore head: final LN fused into its qkv projection ---
    qkv = ln_linear(xf, params["ln_f_g"], params["ln_f_b"],
                    params["score_qkv_w"], params["score_qkv_b"],
                    out_dtype=jnp.bfloat16)
    q, k, _ = _split_heads(qkv, B, Np, num_heads, dh)
    attn_w = attention_score(q, k, scale, N)            # (B, H, Np, Np)
    return attn_w[:, :, :N, :N]


# ----------------------------- parameter init ------------------------------

class _KeyGen:
    def __init__(self, key):
        self.key = key

    def __call__(self):
        self.key, sub = jax.random.split(self.key)
        return sub


def init_params(key, cfg):
    kg = _KeyGen(key)
    D = cfg["feature_dim"]
    C, H, W = cfg["image_size"]
    ph, pw = cfg["patch_size"]
    num_patches = (H // ph) * (W // pw)
    hidden = int(D * cfg["hidden_dim_ratio"])

    def wgt(shape):   # matmul weights stored bf16 (MXU-native, half the HBM)
        return (0.02 * jax.random.normal(kg(), shape, jnp.float32)
                ).astype(jnp.bfloat16)

    p = {
        "patch_w": wgt((C * ph * pw, D)),
        "patch_b": jnp.zeros((D,), jnp.float32),
        "cls_token": jnp.zeros((1, 1, D), jnp.float32),
        "pos_embedding": 0.02 * jax.random.normal(
            kg(), (1, num_patches + 1, D), jnp.float32),
        "ln_f_g": jnp.ones((D,), jnp.float32),
        "ln_f_b": jnp.zeros((D,), jnp.float32),
        "score_qkv_w": wgt((D, 3 * D)),
        "score_qkv_b": jnp.zeros((3 * D,), jnp.float32),
        "blocks": [],
    }
    for _ in range(cfg["depth"] - 1):
        p["blocks"].append({
            "ln1_g": jnp.ones((D,), jnp.float32),
            "ln1_b": jnp.zeros((D,), jnp.float32),
            "qkv_w": wgt((D, 3 * D)),
            "qkv_b": jnp.zeros((3 * D,), jnp.float32),
            "proj_w": wgt((D, D)),
            "proj_b": jnp.zeros((D,), jnp.float32),
            "ln2_g": jnp.ones((D,), jnp.float32),
            "ln2_b": jnp.zeros((D,), jnp.float32),
            "fc1_w": wgt((D, hidden)),
            "fc1_b": jnp.zeros((hidden,), jnp.float32),
            "fc2_w": wgt((hidden, D)),
            "fc2_b": jnp.zeros((D,), jnp.float32),
        })
    return p


# ----------------------------------- main -----------------------------------

if __name__ == "__main__":
    cfg = {
        "image_size": (3, 16, 16),   # (C, H, W)
        "patch_size": (8, 8),
        "feature_dim": 32,
        "depth": 2,                  # transformer runs depth-1 = 1 block
        "num_heads": 4,
        "hidden_dim_ratio": 4.0,
    }
    B = 2

    root = jax.random.PRNGKey(0)
    k_param, k_x = jax.random.split(root)
    params = init_params(k_param, cfg)
    C, H, W = cfg["image_size"]
    x = jax.random.normal(k_x, (B, C, H, W), jnp.float32)   # NCHW, like PyTorch

    fwd = jax.jit(lambda p, xx: vit_attention_score_forward(p, xx, cfg))
    out = jax.block_until_ready(fwd(params, x))

    num_patches = (H // cfg["patch_size"][0]) * (W // cfg["patch_size"][1])
    N = num_patches + 1
    assert out.shape == (B, cfg["num_heads"], N, N), out.shape
    assert bool(jnp.all(jnp.isfinite(out)))
    # softmax rows must sum to 1 (padded keys carry exactly zero weight)
    assert bool(jnp.allclose(out.sum(axis=-1), 1.0, atol=1e-5))
    print("KERNEL_OK")
</pallas_src>

<mosaic_0001>
module attributes {stable_mosaic.version = 11 : i64} {
  func.func @_linear_kernel(%arg0: i32, %arg1: i32, %arg2: i32, %arg3: memref<8x192xf32, #tpu.memory_space<vmem>>, %arg4: memref<192x32xbf16, #tpu.memory_space<vmem>>, %arg5: memref<1x32xf32, #tpu.memory_space<vmem>>, %arg6: memref<8x32xf32, #tpu.memory_space<vmem>>, %arg7: memref<8x32xf32, #tpu.memory_space<vmem>>) attributes {dimension_semantics = [#tpu.dimension_semantics<parallel>, #tpu.dimension_semantics<parallel>, #tpu.dimension_semantics<arbitrary>], iteration_bounds = array<i64: 1, 1, 1>, scalar_prefetch = 0 : i64, scratch_operands = 1 : i64, tpu.core_type = #tpu.core_type<tc>, window_params = [{transform_indices = @transform_0, window_bounds = array<i64: 8, 192>}, {transform_indices = @transform_1, window_bounds = array<i64: 192, 32>}, {transform_indices = @transform_2, window_bounds = array<i64: 1, 32>}, {transform_indices = @transform_3, window_bounds = array<i64: 8, 32>}]} {
    %c0_i32 = arith.constant 0 : i32
    %0 = arith.cmpi eq, %arg2, %c0_i32 : i32
    %1 = arith.extui %0 : i1 to i32
    %c0_i32_0 = arith.constant 0 : i32
    %2 = arith.cmpi ne, %1, %c0_i32_0 : i32
    scf.if %2 {
      %cst_10 = arith.constant 0.000000e+00 : f32
      %13 = vector.broadcast %cst_10 : f32 to vector<8x32xf32>
      %c0_11 = arith.constant 0 : index
      %c0_12 = arith.constant 0 : index
      %14 = vector.load %arg7[%c0_11, %c0_12] : memref<8x32xf32, #tpu.memory_space<vmem>>, vector<8x32xf32>
      tpu.vector_store %arg7[%c0_11, %c0_12], %13 {strides = array<i32>} : memref<8x32xf32, #tpu.memory_space<vmem>>, vector<8x32xf32>,
    } else {
    }
    %c0 = arith.constant 0 : index
    %c0_1 = arith.constant 0 : index
    %3 = vector.load %arg7[%c0, %c0_1] : memref<8x32xf32, #tpu.memory_space<vmem>>, vector<8x32xf32>
    %c0_2 = arith.constant 0 : index
    %c0_3 = arith.constant 0 : index
    %4 = vector.load %arg3[%c0_2, %c0_3] : memref<8x192xf32, #tpu.memory_space<vmem>>, vector<8x192xf32>
    %5 = arith.truncf %4 : vector<8x192xf32> to vector<8x192xbf16>
    %c0_4 = arith.constant 0 : index
    %c0_5 = arith.constant 0 : index
    %6 = vector.load %arg4[%c0_4, %c0_5] : memref<192x32xbf16, #tpu.memory_space<vmem>>, vector<192x32xbf16>
    %cst = arith.constant dense<0.000000e+00> : vector<8x32xf32>
    %7 = tpu.matmul %5, %6, %cst {dimension_numbers = #tpu.dot_dimension_numbers<[1], [0], [0], [1], [0, 0, 1, 1], [], []>} : vector<8x192xbf16>, vector<192x32xbf16>, vector<8x32xf32> -> vector<8x32xf32>
    %8 = arith.addf %3, %7 : vector<8x32xf32>
    %c0_6 = arith.constant 0 : index
    %c0_7 = arith.constant 0 : index
    %9 = vector.load %arg7[%c0_6, %c0_7] : memref<8x32xf32, #tpu.memory_space<vmem>>, vector<8x32xf32>
    tpu.vector_store %arg7[%c0_6, %c0_7], %8 {strides = array<i32>} : memref<8x32xf32, #tpu.memory_space<vmem>>, vector<8x32xf32>,
    %c0_i32_8 = arith.constant 0 : i32
    %10 = arith.cmpi eq, %arg2, %c0_i32_8 : i32
    %11 = arith.extui %10 : i1 to i32
    %c0_i32_9 = arith.constant 0 : i32
    %12 = arith.cmpi ne, %11, %c0_i32_9 : i32
    scf.if %12 {
      %c0_10 = arith.constant 0 : index
      %c0_11 = arith.constant 0 : index
      %13 = vector.load %arg7[%c0_10, %c0_11] : memref<8x32xf32, #tpu.memory_space<vmem>>, vector<8x32xf32>
      %c0_12 = arith.constant 0 : index
      %c0_13 = arith.constant 0 : index
      %14 = vector.load %arg5[%c0_12, %c0_13] : memref<1x32xf32, #tpu.memory_space<vmem>>, vector<1x32xf32>
      %15 = vector.broadcast %14 : vector<1x32xf32> to vector<8x32xf32>
      %16 = arith.addf %13, %15 : vector<8x32xf32>
      %c0_14 = arith.constant 0 : index
      %c0_15 = arith.constant 0 : index
      %17 = vector.load %arg6[%c0_14, %c0_15] : memref<8x32xf32, #tpu.memory_space<vmem>>, vector<8x32xf32>
      tpu.vector_store %arg6[%c0_14, %c0_15], %16 {strides = array<i32>} : memref<8x32xf32, #tpu.memory_space<vmem>>, vector<8x32xf32>,
    } else {
    }
    return
  }
  func.func @transform_0(%arg0: i32, %arg1: i32, %arg2: i32) -> (i32, i32) {
    %c0_i32 = arith.constant 0 : i32
    return %arg0, %arg2 : i32, i32
  }
  func.func @transform_1(%arg0: i32, %arg1: i32, %arg2: i32) -> (i32, i32) {
    %c0_i32 = arith.constant 0 : i32
    return %arg2, %arg1 : i32, i32
  }
  func.func @transform_2(%arg0: i32, %arg1: i32, %arg2: i32) -> (i32, i32) {
    %c0_i32 = arith.constant 0 : i32
    %c0_i32_0 = arith.constant 0 : i32
    return %c0_i32, %arg1 : i32, i32
  }
  func.func @transform_3(%arg0: i32, %arg1: i32, %arg2: i32) -> (i32, i32) {
    %c0_i32 = arith.constant 0 : i32
    return %arg0, %arg1 : i32, i32
  }
}

module attributes {stable_mosaic.version = 11 : i64} {
  func.func @_ln_linear_kernel(%arg0: i32, %arg1: i32, %arg2: memref<16x32xf32, #tpu.memory_space<vmem>>, %arg3: memref<1x32xf32, #tpu.memory_space<vmem>>, %arg4: memref<1x32xf32, #tpu.memory_space<vmem>>, %arg5: memref<32x96xbf16, #tpu.memory_space<vmem>>, %arg6: memref<1x96xf32, #tpu.memory_space<vmem>>, %arg7: memref<16x96xbf16, #tpu.memory_space<vmem>>, %arg8: memref<16x32xbf16, #tpu.memory_space<vmem>>) attributes {dimension_semantics = [#tpu.dimension_semantics<parallel>, #tpu.dimension_semantics<arbitrary>], iteration_bounds = array<i64: 1, 1>, scalar_prefetch = 0 : i64, scratch_operands = 1 : i64, tpu.core_type = #tpu.core_type<tc>, window_params = [{transform_indices = @transform_0, window_bounds = array<i64: 16, 32>}, {pipeline_mode = #tpu.pipeline_mode<synchronous>, transform_indices = @transform_1, window_bounds = array<i64: 1, 32>}, {pipeline_mode = #tpu.pipeline_mode<synchronous>, transform_indices = @transform_2, window_bounds = array<i64: 1, 32>}, {transform_indices = @transform_3, window_bounds = array<i64: 32, 96>}, {transform_indices = @transform_4, window_bounds = array<i64: 1, 96>}, {transform_indices = @transform_5, window_bounds = array<i64: 16, 96>}]} {
    %c0_i32 = arith.constant 0 : i32
    %0 = arith.cmpi eq, %arg1, %c0_i32 : i32
    %1 = arith.extui %0 : i1 to i32
    %c0_i32_0 = arith.constant 0 : i32
    %2 = arith.cmpi ne, %1, %c0_i32_0 : i32
    scf.if %2 {
      %c0_8 = arith.constant 0 : index
      %c0_9 = arith.constant 0 : index
      %11 = vector.load %arg2[%c0_8, %c0_9] : memref<16x32xf32, #tpu.memory_space<vmem>>, vector<16x32xf32>
      %cst_10 = arith.constant dense<0.000000e+00> : vector<16xf32>
      %12 = vector.multi_reduction <add>, %11, %cst_10 [1] : vector<16x32xf32> to vector<16xf32>
      %13 = vector.shape_cast %12 : vector<16xf32> to vector<16x1xf32>
      %cst_11 = arith.constant 3.200000e+01 : f32
      %14 = vector.broadcast %cst_11 : f32 to vector<16x1xf32>
      %15 = arith.divf %13, %14 : vector<16x1xf32>
      %16 = vector.broadcast %15 : vector<16x1xf32> to vector<16x32xf32>
      %17 = arith.subf %11, %16 : vector<16x32xf32>
      %18 = arith.mulf %17, %17 : vector<16x32xf32>
      %cst_12 = arith.constant dense<0.000000e+00> : vector<16xf32>
      %19 = vector.multi_reduction <add>, %18, %cst_12 [1] : vector<16x32xf32> to vector<16xf32>
      %20 = vector.shape_cast %19 : vector<16xf32> to vector<16x1xf32>
      %cst_13 = arith.constant 3.200000e+01 : f32
      %21 = vector.broadcast %cst_13 : f32 to vector<16x1xf32>
      %22 = arith.divf %20, %21 : vector<16x1xf32>
      %23 = vector.broadcast %15 : vector<16x1xf32> to vector<16x32xf32>
      %24 = arith.subf %11, %23 : vector<16x32xf32>
      %cst_14 = arith.constant 9.99999974E-6 : f32
      %25 = vector.broadcast %cst_14 : f32 to vector<16x1xf32>
      %26 = arith.addf %22, %25 : vector<16x1xf32>
      %27 = math.rsqrt %26 : vector<16x1xf32>
      %28 = vector.broadcast %27 : vector<16x1xf32> to vector<16x32xf32>
      %29 = arith.mulf %24, %28 : vector<16x32xf32>
      %c0_15 = arith.constant 0 : index
      %c0_16 = arith.constant 0 : index
      %30 = vector.load %arg3[%c0_15, %c0_16] : memref<1x32xf32, #tpu.memory_space<vmem>>, vector<1x32xf32>
      %31 = vector.broadcast %30 : vector<1x32xf32> to vector<16x32xf32>
      %32 = arith.mulf %29, %31 : vector<16x32xf32>
      %c0_17 = arith.constant 0 : index
      %c0_18 = arith.constant 0 : index
      %33 = vector.load %arg4[%c0_17, %c0_18] : memref<1x32xf32, #tpu.memory_space<vmem>>, vector<1x32xf32>
      %34 = vector.broadcast %33 : vector<1x32xf32> to vector<16x32xf32>
      %35 = arith.addf %32, %34 : vector<16x32xf32>
      %36 = arith.truncf %35 : vector<16x32xf32> to vector<16x32xbf16>
      %c0_19 = arith.constant 0 : index
      %c0_20 = arith.constant 0 : index
      %37 = vector.load %arg8[%c0_19, %c0_20] : memref<16x32xbf16, #tpu.memory_space<vmem>>, vector<16x32xbf16>
      tpu.vector_store %arg8[%c0_19, %c0_20], %36 {strides = array<i32>} : memref<16x32xbf16, #tpu.memory_space<vmem>>, vector<16x32xbf16>,
    } else {
    }
    %c0 = arith.constant 0 : index
    %c0_1 = arith.constant 0 : index
    %3 = vector.load %arg8[%c0, %c0_1] : memref<16x32xbf16, #tpu.memory_space<vmem>>, vector<16x32xbf16>
    %c0_2 = arith.constant 0 : index
    %c0_3 = arith.constant 0 : index
    %4 = vector.load %arg5[%c0_2, %c0_3] : memref<32x96xbf16, #tpu.memory_space<vmem>>, vector<32x96xbf16>
    %cst = arith.constant dense<0.000000e+00> : vector<16x96xf32>
    %5 = tpu.matmul %3, %4, %cst {dimension_numbers = #tpu.dot_dimension_numbers<[1], [0], [0], [1], [0, 0, 1, 1], [], []>} : vector<16x32xbf16>, vector<32x96xbf16>, vector<16x96xf32> -> vector<16x96xf32>
    %c0_4 = arith.constant 0 : index
    %c0_5 = arith.constant 0 : index
    %6 = vector.load %arg6[%c0_4, %c0_5] : memref<1x96xf32, #tpu.memory_space<vmem>>, vector<1x96xf32>
    %7 = vector.broadcast %6 : vector<1x96xf32> to vector<16x96xf32>
    %8 = arith.addf %5, %7 : vector<16x96xf32>
    %9 = arith.truncf %8 : vector<16x96xf32> to vector<16x96xbf16>
    %c0_6 = arith.constant 0 : index
    %c0_7 = arith.constant 0 : index
    %10 = vector.load %arg7[%c0_6, %c0_7] : memref<16x96xbf16, #tpu.memory_space<vmem>>, vector<16x96xbf16>
    tpu.vector_store %arg7[%c0_6, %c0_7], %9 {strides = array<i32>} : memref<16x96xbf16, #tpu.memory_space<vmem>>, vector<16x96xbf16>,
    return
  }
  func.func @transform_0(%arg0: i32, %arg1: i32) -> (i32, i32) {
    %c0_i32 = arith.constant 0 : i32
    %c0_i32_0 = arith.constant 0 : i32
    return %arg0, %c0_i32 : i32, i32
  }
  func.func @transform_1(%arg0: i32, %arg1: i32) -> (i32, i32) {
    %c0_i32 = arith.constant 0 : i32
    %c0_i32_0 = arith.constant 0 : i32
    %c0_i32_1 = arith.constant 0 : i32
    return %c0_i32, %c0_i32_0 : i32, i32
  }
  func.func @transform_2(%arg0: i32, %arg1: i32) -> (i32, i32) {
    %c0_i32 = arith.constant 0 : i32
    %c0_i32_0 = arith.constant 0 : i32
    %c0_i32_1 = arith.constant 0 : i32
    return %c0_i32, %c0_i32_0 : i32, i32
  }
  func.func @transform_3(%arg0: i32, %arg1: i32) -> (i32, i32) {
    %c0_i32 = arith.constant 0 : i32
    %c0_i32_0 = arith.constant 0 : i32
    return %c0_i32, %arg1 : i32, i32
  }
  func.func @transform_4(%arg0: i32, %arg1: i32) -> (i32, i32) {
    %c0_i32 = arith.constant 0 : i32
    %c0_i32_0 = arith.constant 0 : i32
    return %c0_i32, %arg1 : i32, i32
  }
  func.func @transform_5(%arg0: i32, %arg1: i32) -> (i32, i32) {
    %c0_i32 = arith.constant 0 : i32
    return %arg0, %arg1 : i32, i32
  }
}

module attributes {stable_mosaic.version = 11 : i64} {
  func.func @_mha_kernel(%arg0: i32, %arg1: i32, %arg2: memref<1x1x8x8xbf16, #tpu.memory_space<vmem>>, %arg3: memref<1x1x8x8xbf16, #tpu.memory_space<vmem>>, %arg4: memref<1x1x8x8xbf16, #tpu.memory_space<vmem>>, %arg5: memref<1x1x8x8xbf16, #tpu.memory_space<vmem>>) attributes {dimension_semantics = [#tpu.dimension_semantics<parallel>, #tpu.dimension_semantics<parallel>], iteration_bounds = array<i64: 2, 4>, scalar_prefetch = 0 : i64, scratch_operands = 0 : i64, tpu.core_type = #tpu.core_type<tc>, window_params = [{transform_indices = @transform_0, window_bounds = array<i64: 1, 1, 8, 8>}, {transform_indices = @transform_1, window_bounds = array<i64: 1, 1, 8, 8>}, {transform_indices = @transform_2, window_bounds = array<i64: 1, 1, 8, 8>}, {transform_indices = @transform_3, window_bounds = array<i64: 1, 1, 8, 8>}]} {
    %c0 = arith.constant 0 : index
    %c0_0 = arith.constant 0 : index
    %c0_1 = arith.constant 0 : index
    %c0_2 = arith.constant 0 : index
    %0 = vector.load %arg2[%c0, %c0_0, %c0_1, %c0_2] : memref<1x1x8x8xbf16, #tpu.memory_space<vmem>>, vector<1x1x8x8xbf16>
    %1 = vector.shape_cast %0 : vector<1x1x8x8xbf16> to vector<8x8xbf16>
    %c0_3 = arith.constant 0 : index
    %c0_4 = arith.constant 0 : index
    %c0_5 = arith.constant 0 : index
    %c0_6 = arith.constant 0 : index
    %2 = vector.load %arg3[%c0_3, %c0_4, %c0_5, %c0_6] : memref<1x1x8x8xbf16, #tpu.memory_space<vmem>>, vector<1x1x8x8xbf16>
    %3 = vector.shape_cast %2 : vector<1x1x8x8xbf16> to vector<8x8xbf16>
    %c0_7 = arith.constant 0 : index
    %c0_8 = arith.constant 0 : index
    %c0_9 = arith.constant 0 : index
    %c0_10 = arith.constant 0 : index
    %4 = vector.load %arg4[%c0_7, %c0_8, %c0_9, %c0_10] : memref<1x1x8x8xbf16, #tpu.memory_space<vmem>>, vector<1x1x8x8xbf16>
    %5 = vector.shape_cast %4 : vector<1x1x8x8xbf16> to vector<8x8xbf16>
    %cst = arith.constant dense<0.000000e+00> : vector<8x8xf32>
    %6 = tpu.matmul %1, %3, %cst {dimension_numbers = #tpu.dot_dimension_numbers<[1], [1], [0], [0], [0, 0, 1, 0], [], []>} : vector<8x8xbf16>, vector<8x8xbf16>, vector<8x8xf32> -> vector<8x8xf32>
    %cst_11 = arith.constant 0.353553385 : f32
    %7 = vector.broadcast %cst_11 : f32 to vector<8x8xf32>
    %8 = arith.mulf %6, %7 : vector<8x8xf32>
    %9 = tpu.iota {dimensions = array<i32: 1>} : vector<8x8xi32>
    %c5_i32 = arith.constant 5 : i32
    %10 = vector.broadcast %c5_i32 : i32 to vector<8x8xi32>
    %11 = arith.cmpi slt, %9, %10 : vector<8x8xi32>
    %cst_12 = arith.constant -1.000000e+30 : f32
    %12 = vector.broadcast %cst_12 : f32 to vector<8x8xf32>
    %13 = arith.select %11, %8, %12 : vector<8x8xi1>, vector<8x8xf32>
    %cst_13 = arith.constant dense<0xFF800000> : vector<8xf32>
    %14 = vector.multi_reduction <maximumf>, %13, %cst_13 [1] : vector<8x8xf32> to vector<8xf32>
    %15 = vector.shape_cast %14 : vector<8xf32> to vector<8x1xf32>
    %16 = vector.broadcast %15 : vector<8x1xf32> to vector<8x8xf32>
    %17 = arith.subf %13, %16 : vector<8x8xf32>
    %18 = math.exp %17 : vector<8x8xf32>
    %cst_14 = arith.constant dense<0.000000e+00> : vector<8xf32>
    %19 = vector.multi_reduction <add>, %18, %cst_14 [1] : vector<8x8xf32> to vector<8xf32>
    %20 = vector.shape_cast %19 : vector<8xf32> to vector<8x1xf32>
    %cst_15 = arith.constant 1.000000e+00 : f32
    %21 = vector.broadcast %cst_15 : f32 to vector<8x1xf32>
    %22 = arith.divf %21, %20 : vector<8x1xf32>
    %23 = vector.broadcast %22 : vector<8x1xf32> to vector<8x8xf32>
    %24 = arith.mulf %18, %23 : vector<8x8xf32>
    %25 = arith.truncf %24 : vector<8x8xf32> to vector<8x8xbf16>
    %cst_16 = arith.constant dense<0.000000e+00> : vector<8x8xf32>
    %26 = tpu.matmul %25, %5, %cst_16 {dimension_numbers = #tpu.dot_dimension_numbers<[1], [0], [0], [1], [0, 0, 1, 1], [], []>} : vector<8x8xbf16>, vector<8x8xbf16>, vector<8x8xf32> -> vector<8x8xf32>
    %27 = arith.truncf %26 : vector<8x8xf32> to vector<8x8xbf16>
    %c0_17 = arith.constant 0 : index
    %c0_18 = arith.constant 0 : index
    %c0_19 = arith.constant 0 : index
    %c0_20 = arith.constant 0 : index
    %28 = vector.load %arg5[%c0_17, %c0_18, %c0_19, %c0_20] : memref<1x1x8x8xbf16, #tpu.memory_space<vmem>>, vector<1x1x8x8xbf16>
    %29 = vector.shape_cast %28 : vector<1x1x8x8xbf16> to vector<8x8xbf16>
    %30 = vector.shape_cast %27 : vector<8x8xbf16> to vector<1x1x8x8xbf16>
    tpu.vector_store %arg5[%c0_17, %c0_18, %c0_19, %c0_20], %30 {strides = array<i32>} : memref<1x1x8x8xbf16, #tpu.memory_space<vmem>>, vector<1x1x8x8xbf16>,
    return
  }
  func.func @transform_0(%arg0: i32, %arg1: i32) -> (i32, i32, i32, i32) {
    %c0_i32 = arith.constant 0 : i32
    %c0_i32_0 = arith.constant 0 : i32
    %c0_i32_1 = arith.constant 0 : i32
    return %arg0, %arg1, %c0_i32, %c0_i32_0 : i32, i32, i32, i32
  }
  func.func @transform_1(%arg0: i32, %arg1: i32) -> (i32, i32, i32, i32) {
    %c0_i32 = arith.constant 0 : i32
    %c0_i32_0 = arith.constant 0 : i32
    %c0_i32_1 = arith.constant 0 : i32
    return %arg0, %arg1, %c0_i32, %c0_i32_0 : i32, i32, i32, i32
  }
  func.func @transform_2(%arg0: i32, %arg1: i32) -> (i32, i32, i32, i32) {
    %c0_i32 = arith.constant 0 : i32
    %c0_i32_0 = arith.constant 0 : i32
    %c0_i32_1 = arith.constant 0 : i32
    return %arg0, %arg1, %c0_i32, %c0_i32_0 : i32, i32, i32, i32
  }
  func.func @transform_3(%arg0: i32, %arg1: i32) -> (i32, i32, i32, i32) {
    %c0_i32 = arith.constant 0 : i32
    %c0_i32_0 = arith.constant 0 : i32
    %c0_i32_1 = arith.constant 0 : i32
    return %arg0, %arg1, %c0_i32, %c0_i32_0 : i32, i32, i32, i32
  }
}

module attributes {stable_mosaic.version = 11 : i64} {
  func.func @_linear_kernel(%arg0: i32, %arg1: i32, %arg2: i32, %arg3: memref<16x32xbf16, #tpu.memory_space<vmem>>, %arg4: memref<32x32xbf16, #tpu.memory_space<vmem>>, %arg5: memref<1x32xf32, #tpu.memory_space<vmem>>, %arg6: memref<16x32xf32, #tpu.memory_space<vmem>>, %arg7: memref<16x32xf32, #tpu.memory_space<vmem>>, %arg8: memref<16x32xf32, #tpu.memory_space<vmem>>) attributes {dimension_semantics = [#tpu.dimension_semantics<parallel>, #tpu.dimension_semantics<parallel>, #tpu.dimension_semantics<arbitrary>], iteration_bounds = array<i64: 1, 1, 1>, scalar_prefetch = 0 : i64, scratch_operands = 1 : i64, tpu.core_type = #tpu.core_type<tc>, window_params = [{transform_indices = @transform_0, window_bounds = array<i64: 16, 32>}, {transform_indices = @transform_1, window_bounds = array<i64: 32, 32>}, {transform_indices = @transform_2, window_bounds = array<i64: 1, 32>}, {transform_indices = @transform_3, window_bounds = array<i64: 16, 32>}, {transform_indices = @transform_4, window_bounds = array<i64: 16, 32>}]} {
    %c0_i32 = arith.constant 0 : i32
    %0 = arith.cmpi eq, %arg2, %c0_i32 : i32
    %1 = arith.extui %0 : i1 to i32
    %c0_i32_0 = arith.constant 0 : i32
    %2 = arith.cmpi ne, %1, %c0_i32_0 : i32
    scf.if %2 {
      %cst_10 = arith.constant 0.000000e+00 : f32
      %12 = vector.broadcast %cst_10 : f32 to vector<16x32xf32>
      %c0_11 = arith.constant 0 : index
      %c0_12 = arith.constant 0 : index
      %13 = vector.load %arg8[%c0_11, %c0_12] : memref<16x32xf32, #tpu.memory_space<vmem>>, vector<16x32xf32>
      tpu.vector_store %arg8[%c0_11, %c0_12], %12 {strides = array<i32>} : memref<16x32xf32, #tpu.memory_space<vmem>>, vector<16x32xf32>,
    } else {
    }
    %c0 = arith.constant 0 : index
    %c0_1 = arith.constant 0 : index
    %3 = vector.load %arg8[%c0, %c0_1] : memref<16x32xf32, #tpu.memory_space<vmem>>, vector<16x32xf32>
    %c0_2 = arith.constant 0 : index
    %c0_3 = arith.constant 0 : index
    %4 = vector.load %arg3[%c0_2, %c0_3] : memref<16x32xbf16, #tpu.memory_space<vmem>>, vector<16x32xbf16>
    %c0_4 = arith.constant 0 : index
    %c0_5 = arith.constant 0 : index
    %5 = vector.load %arg4[%c0_4, %c0_5] : memref<32x32xbf16, #tpu.memory_space<vmem>>, vector<32x32xbf16>
    %cst = arith.constant dense<0.000000e+00> : vector<16x32xf32>
    %6 = tpu.matmul %4, %5, %cst {dimension_numbers = #tpu.dot_dimension_numbers<[1], [0], [0], [1], [0, 0, 1, 1], [], []>} : vector<16x32xbf16>, vector<32x32xbf16>, vector<16x32xf32> -> vector<16x32xf32>
    %7 = arith.addf %3, %6 : vector<16x32xf32>
    %c0_6 = arith.constant 0 : index
    %c0_7 = arith.constant 0 : index
    %8 = vector.load %arg8[%c0_6, %c0_7] : memref<16x32xf32, #tpu.memory_space<vmem>>, vector<16x32xf32>
    tpu.vector_store %arg8[%c0_6, %c0_7], %7 {strides = array<i32>} : memref<16x32xf32, #tpu.memory_space<vmem>>, vector<16x32xf32>,
    %c0_i32_8 = arith.constant 0 : i32
    %9 = arith.cmpi eq, %arg2, %c0_i32_8 : i32
    %10 = arith.extui %9 : i1 to i32
    %c0_i32_9 = arith.constant 0 : i32
    %11 = arith.cmpi ne, %10, %c0_i32_9 : i32
    scf.if %11 {
      %c0_10 = arith.constant 0 : index
      %c0_11 = arith.constant 0 : index
      %12 = vector.load %arg8[%c0_10, %c0_11] : memref<16x32xf32, #tpu.memory_space<vmem>>, vector<16x32xf32>
      %c0_12 = arith.constant 0 : index
      %c0_13 = arith.constant 0 : index
      %13 = vector.load %arg5[%c0_12, %c0_13] : memref<1x32xf32, #tpu.memory_space<vmem>>, vector<1x32xf32>
      %14 = vector.broadcast %13 : vector<1x32xf32> to vector<16x32xf32>
      %15 = arith.addf %12, %14 : vector<16x32xf32>
      %c0_14 = arith.constant 0 : index
      %c0_15 = arith.constant 0 : index
      %16 = vector.load %arg6[%c0_14, %c0_15] : memref<16x32xf32, #tpu.memory_space<vmem>>, vector<16x32xf32>
      %17 = arith.addf %15, %16 : vector<16x32xf32>
      %c0_16 = arith.constant 0 : index
      %c0_17 = arith.constant 0 : index
      %18 = vector.load %arg7[%c0_16, %c0_17] : memref<16x32xf32, #tpu.memory_space<vmem>>, vector<16x32xf32>
      tpu.vector_store %arg7[%c0_16, %c0_17], %17 {strides = array<i32>} : memref<16x32xf32, #tpu.memory_space<vmem>>, vector<16x32xf32>,
    } else {
    }
    return
  }
  func.func @transform_0(%arg0: i32, %arg1: i32, %arg2: i32) -> (i32, i32) {
    %c0_i32 = arith.constant 0 : i32
    return %arg0, %arg2 : i32, i32
  }
  func.func @transform_1(%arg0: i32, %arg1: i32, %arg2: i32) -> (i32, i32) {
    %c0_i32 = arith.constant 0 : i32
    return %arg2, %arg1 : i32, i32
  }
  func.func @transform_2(%arg0: i32, %arg1: i32, %arg2: i32) -> (i32, i32) {
    %c0_i32 = arith.constant 0 : i32
    %c0_i32_0 = arith.constant 0 : i32
    return %c0_i32, %arg1 : i32, i32
  }
  func.func @transform_3(%arg0: i32, %arg1: i32, %arg2: i32) -> (i32, i32) {
    %c0_i32 = arith.constant 0 : i32
    return %arg0, %arg1 : i32, i32
  }
  func.func @transform_4(%arg0: i32, %arg1: i32, %arg2: i32) -> (i32, i32) {
    %c0_i32 = arith.constant 0 : i32
    return %arg0, %arg1 : i32, i32
  }
}

module attributes {stable_mosaic.version = 11 : i64} {
  func.func @_ln_linear_kernel(%arg0: i32, %arg1: i32, %arg2: memref<16x32xf32, #tpu.memory_space<vmem>>, %arg3: memref<1x32xf32, #tpu.memory_space<vmem>>, %arg4: memref<1x32xf32, #tpu.memory_space<vmem>>, %arg5: memref<32x128xbf16, #tpu.memory_space<vmem>>, %arg6: memref<1x128xf32, #tpu.memory_space<vmem>>, %arg7: memref<16x128xbf16, #tpu.memory_space<vmem>>, %arg8: memref<16x32xbf16, #tpu.memory_space<vmem>>) attributes {dimension_semantics = [#tpu.dimension_semantics<parallel>, #tpu.dimension_semantics<arbitrary>], iteration_bounds = array<i64: 1, 1>, scalar_prefetch = 0 : i64, scratch_operands = 1 : i64, tpu.core_type = #tpu.core_type<tc>, window_params = [{transform_indices = @transform_0, window_bounds = array<i64: 16, 32>}, {pipeline_mode = #tpu.pipeline_mode<synchronous>, transform_indices = @transform_1, window_bounds = array<i64: 1, 32>}, {pipeline_mode = #tpu.pipeline_mode<synchronous>, transform_indices = @transform_2, window_bounds = array<i64: 1, 32>}, {transform_indices = @transform_3, window_bounds = array<i64: 32, 128>}, {transform_indices = @transform_4, window_bounds = array<i64: 1, 128>}, {transform_indices = @transform_5, window_bounds = array<i64: 16, 128>}]} {
    %c0_i32 = arith.constant 0 : i32
    %0 = arith.cmpi eq, %arg1, %c0_i32 : i32
    %1 = arith.extui %0 : i1 to i32
    %c0_i32_0 = arith.constant 0 : i32
    %2 = arith.cmpi ne, %1, %c0_i32_0 : i32
    scf.if %2 {
      %c0_24 = arith.constant 0 : index
      %c0_25 = arith.constant 0 : index
      %55 = vector.load %arg2[%c0_24, %c0_25] : memref<16x32xf32, #tpu.memory_space<vmem>>, vector<16x32xf32>
      %cst_26 = arith.constant dense<0.000000e+00> : vector<16xf32>
      %56 = vector.multi_reduction <add>, %55, %cst_26 [1] : vector<16x32xf32> to vector<16xf32>
      %57 = vector.shape_cast %56 : vector<16xf32> to vector<16x1xf32>
      %cst_27 = arith.constant 3.200000e+01 : f32
      %58 = vector.broadcast %cst_27 : f32 to vector<16x1xf32>
      %59 = arith.divf %57, %58 : vector<16x1xf32>
      %60 = vector.broadcast %59 : vector<16x1xf32> to vector<16x32xf32>
      %61 = arith.subf %55, %60 : vector<16x32xf32>
      %62 = arith.mulf %61, %61 : vector<16x32xf32>
      %cst_28 = arith.constant dense<0.000000e+00> : vector<16xf32>
      %63 = vector.multi_reduction <add>, %62, %cst_28 [1] : vector<16x32xf32> to vector<16xf32>
      %64 = vector.shape_cast %63 : vector<16xf32> to vector<16x1xf32>
      %cst_29 = arith.constant 3.200000e+01 : f32
      %65 = vector.broadcast %cst_29 : f32 to vector<16x1xf32>
      %66 = arith.divf %64, %65 : vector<16x1xf32>
      %67 = vector.broadcast %59 : vector<16x1xf32> to vector<16x32xf32>
      %68 = arith.subf %55, %67 : vector<16x32xf32>
      %cst_30 = arith.constant 9.99999974E-6 : f32
      %69 = vector.broadcast %cst_30 : f32 to vector<16x1xf32>
      %70 = arith.addf %66, %69 : vector<16x1xf32>
      %71 = math.rsqrt %70 : vector<16x1xf32>
      %72 = vector.broadcast %71 : vector<16x1xf32> to vector<16x32xf32>
      %73 = arith.mulf %68, %72 : vector<16x32xf32>
      %c0_31 = arith.constant 0 : index
      %c0_32 = arith.constant 0 : index
      %74 = vector.load %arg3[%c0_31, %c0_32] : memref<1x32xf32, #tpu.memory_space<vmem>>, vector<1x32xf32>
      %75 = vector.broadcast %74 : vector<1x32xf32> to vector<16x32xf32>
      %76 = arith.mulf %73, %75 : vector<16x32xf32>
      %c0_33 = arith.constant 0 : index
      %c0_34 = arith.constant 0 : index
      %77 = vector.load %arg4[%c0_33, %c0_34] : memref<1x32xf32, #tpu.memory_space<vmem>>, vector<1x32xf32>
      %78 = vector.broadcast %77 : vector<1x32xf32> to vector<16x32xf32>
      %79 = arith.addf %76, %78 : vector<16x32xf32>
      %80 = arith.truncf %79 : vector<16x32xf32> to vector<16x32xbf16>
      %c0_35 = arith.constant 0 : index
      %c0_36 = arith.constant 0 : index
      %81 = vector.load %arg8[%c0_35, %c0_36] : memref<16x32xbf16, #tpu.memory_space<vmem>>, vector<16x32xbf16>
      tpu.vector_store %arg8[%c0_35, %c0_36], %80 {strides = array<i32>} : memref<16x32xbf16, #tpu.memory_space<vmem>>, vector<16x32xbf16>,
    } else {
    }
    %c0 = arith.constant 0 : index
    %c0_1 = arith.constant 0 : index
    %3 = vector.load %arg8[%c0, %c0_1] : memref<16x32xbf16, #tpu.memory_space<vmem>>, vector<16x32xbf16>
    %c0_2 = arith.constant 0 : index
    %c0_3 = arith.constant 0 : index
    %4 = vector.load %arg5[%c0_2, %c0_3] : memref<32x128xbf16, #tpu.memory_space<vmem>>, vector<32x128xbf16>
    %cst = arith.constant dense<0.000000e+00> : vector<16x128xf32>
    %5 = tpu.matmul %3, %4, %cst {dimension_numbers = #tpu.dot_dimension_numbers<[1], [0], [0], [1], [0, 0, 1, 1], [], []>} : vector<16x32xbf16>, vector<32x128xbf16>, vector<16x128xf32> -> vector<16x128xf32>
    %c0_4 = arith.constant 0 : index
    %c0_5 = arith.constant 0 : index
    %6 = vector.load %arg6[%c0_4, %c0_5] : memref<1x128xf32, #tpu.memory_space<vmem>>, vector<1x128xf32>
    %7 = vector.broadcast %6 : vector<1x128xf32> to vector<16x128xf32>
    %8 = arith.addf %5, %7 : vector<16x128xf32>
    %cst_6 = arith.constant 5.000000e-01 : f32
    %9 = vector.broadcast %cst_6 : f32 to vector<16x128xf32>
    %10 = arith.mulf %9, %8 : vector<16x128xf32>
    %cst_7 = arith.constant 0.707106769 : f32
    %11 = vector.broadcast %cst_7 : f32 to vector<16x128xf32>
    %12 = arith.mulf %8, %11 : vector<16x128xf32>
    %cst_8 = arith.constant 0.000000e+00 : f32
    %13 = vector.broadcast %cst_8 : f32 to vector<16x128xf32>
    %14 = arith.cmpf oge, %12, %13 : vector<16x128xf32>
    %cst_9 = arith.constant 1.000000e+00 : f32
    %cst_10 = arith.constant -1.000000e+00 : f32
    %15 = vector.broadcast %cst_9 : f32 to vector<16x128xf32>
    %16 = vector.broadcast %cst_10 : f32 to vector<16x128xf32>
    %17 = arith.select %14, %15, %16 : vector<16x128xi1>, vector<16x128xf32>
    %18 = math.absf %12 : vector<16x128xf32>
    %cst_11 = arith.constant 0.327591091 : f32
    %19 = vector.broadcast %cst_11 : f32 to vector<16x128xf32>
    %20 = arith.mulf %19, %18 : vector<16x128xf32>
    %cst_12 = arith.constant 1.000000e+00 : f32
    %21 = vector.broadcast %cst_12 : f32 to vector<16x128xf32>
    %22 = arith.addf %21, %20 : vector<16x128xf32>
    %23 = tpu.reciprocal %22 {approx = true} : vector<16x128xf32> -> vector<16x128xf32>
    %24 = arith.mulf %22, %23 : vector<16x128xf32>
    %cst_13 = arith.constant 2.000000e+00 : f32
    %25 = vector.broadcast %cst_13 : f32 to vector<16x128xf32>
    %26 = arith.subf %25, %24 : vector<16x128xf32>
    %27 = arith.mulf %23, %26 : vector<16x128xf32>
    %cst_14 = arith.constant 1.06140542 : f32
    %28 = vector.broadcast %cst_14 : f32 to vector<16x128xf32>
    %29 = arith.mulf %28, %27 : vector<16x128xf32>
    %cst_15 = arith.constant -1.45315206 : f32
    %30 = vector.broadcast %cst_15 : f32 to vector<16x128xf32>
    %31 = arith.addf %29, %30 : vector<16x128xf32>
    %32 = arith.mulf %31, %27 : vector<16x128xf32>
    %cst_16 = arith.constant 1.42141378 : f32
    %33 = vector.broadcast %cst_16 : f32 to vector<16x128xf32>
    %34 = arith.addf %32, %33 : vector<16x128xf32>
    %35 = arith.mulf %34, %27 : vector<16x128xf32>
    %cst_17 = arith.constant -0.284496725 : f32
    %36 = vector.broadcast %cst_17 : f32 to vector<16x128xf32>
    %37 = arith.addf %35, %36 : vector<16x128xf32>
    %38 = arith.mulf %37, %27 : vector<16x128xf32>
    %cst_18 = arith.constant 0.254829586 : f32
    %39 = vector.broadcast %cst_18 : f32 to vector<16x128xf32>
    %40 = arith.addf %38, %39 : vector<16x128xf32>
    %41 = arith.mulf %40, %27 : vector<16x128xf32>
    %cst_19 = arith.constant 0.000000e+00 : f32
    %42 = vector.broadcast %cst_19 : f32 to vector<16x128xf32>
    %43 = arith.subf %42, %18 : vector<16x128xf32>
    %44 = arith.mulf %43, %18 : vector<16x128xf32>
    %45 = math.exp %44 : vector<16x128xf32>
    %46 = arith.mulf %41, %45 : vector<16x128xf32>
    %cst_20 = arith.constant 1.000000e+00 : f32
    %47 = vector.broadcast %cst_20 : f32 to vector<16x128xf32>
    %48 = arith.subf %47, %46 : vector<16x128xf32>
    %49 = arith.mulf %17, %48 : vector<16x128xf32>
    %cst_21 = arith.constant 1.000000e+00 : f32
    %50 = vector.broadcast %cst_21 : f32 to vector<16x128xf32>
    %51 = arith.addf %50, %49 : vector<16x128xf32>
    %52 = arith.mulf %10, %51 : vector<16x128xf32>
    %53 = arith.truncf %52 : vector<16x128xf32> to vector<16x128xbf16>
    %c0_22 = arith.constant 0 : index
    %c0_23 = arith.constant 0 : index
    %54 = vector.load %arg7[%c0_22, %c0_23] : memref<16x128xbf16, #tpu.memory_space<vmem>>, vector<16x128xbf16>
    tpu.vector_store %arg7[%c0_22, %c0_23], %53 {strides = array<i32>} : memref<16x128xbf16, #tpu.memory_space<vmem>>, vector<16x128xbf16>,
    return
  }
  func.func @transform_0(%arg0: i32, %arg1: i32) -> (i32, i32) {
    %c0_i32 = arith.constant 0 : i32
    %c0_i32_0 = arith.constant 0 : i32
    return %arg0, %c0_i32 : i32, i32
  }
  func.func @transform_1(%arg0: i32, %arg1: i32) -> (i32, i32) {
    %c0_i32 = arith.constant 0 : i32
    %c0_i32_0 = arith.constant 0 : i32
    %c0_i32_1 = arith.constant 0 : i32
    return %c0_i32, %c0_i32_0 : i32, i32
  }
  func.func @transform_2(%arg0: i32, %arg1: i32) -> (i32, i32) {
    %c0_i32 = arith.constant 0 : i32
    %c0_i32_0 = arith.constant 0 : i32
    %c0_i32_1 = arith.constant 0 : i32
    return %c0_i32, %c0_i32_0 : i32, i32
  }
  func.func @transform_3(%arg0: i32, %arg1: i32) -> (i32, i32) {
    %c0_i32 = arith.constant 0 : i32
    %c0_i32_0 = arith.constant 0 : i32
    return %c0_i32, %arg1 : i32, i32
  }
  func.func @transform_4(%arg0: i32, %arg1: i32) -> (i32, i32) {
    %c0_i32 = arith.constant 0 : i32
    %c0_i32_0 = arith.constant 0 : i32
    return %c0_i32, %arg1 : i32, i32
  }
  func.func @transform_5(%arg0: i32, %arg1: i32) -> (i32, i32) {
    %c0_i32 = arith.constant 0 : i32
    return %arg0, %arg1 : i32, i32
  }
}

module attributes {stable_mosaic.version = 11 : i64} {
  func.func @_linear_kernel(%arg0: i32, %arg1: i32, %arg2: i32, %arg3: memref<16x128xbf16, #tpu.memory_space<vmem>>, %arg4: memref<128x32xbf16, #tpu.memory_space<vmem>>, %arg5: memref<1x32xf32, #tpu.memory_space<vmem>>, %arg6: memref<16x32xf32, #tpu.memory_space<vmem>>, %arg7: memref<16x32xf32, #tpu.memory_space<vmem>>, %arg8: memref<16x32xf32, #tpu.memory_space<vmem>>) attributes {dimension_semantics = [#tpu.dimension_semantics<parallel>, #tpu.dimension_semantics<parallel>, #tpu.dimension_semantics<arbitrary>], iteration_bounds = array<i64: 1, 1, 1>, scalar_prefetch = 0 : i64, scratch_operands = 1 : i64, tpu.core_type = #tpu.core_type<tc>, window_params = [{transform_indices = @transform_0, window_bounds = array<i64: 16, 128>}, {transform_indices = @transform_1, window_bounds = array<i64: 128, 32>}, {transform_indices = @transform_2, window_bounds = array<i64: 1, 32>}, {transform_indices = @transform_3, window_bounds = array<i64: 16, 32>}, {transform_indices = @transform_4, window_bounds = array<i64: 16, 32>}]} {
    %c0_i32 = arith.constant 0 : i32
    %0 = arith.cmpi eq, %arg2, %c0_i32 : i32
    %1 = arith.extui %0 : i1 to i32
    %c0_i32_0 = arith.constant 0 : i32
    %2 = arith.cmpi ne, %1, %c0_i32_0 : i32
    scf.if %2 {
      %cst_10 = arith.constant 0.000000e+00 : f32
      %12 = vector.broadcast %cst_10 : f32 to vector<16x32xf32>
      %c0_11 = arith.constant 0 : index
      %c0_12 = arith.constant 0 : index
      %13 = vector.load %arg8[%c0_11, %c0_12] : memref<16x32xf32, #tpu.memory_space<vmem>>, vector<16x32xf32>
      tpu.vector_store %arg8[%c0_11, %c0_12], %12 {strides = array<i32>} : memref<16x32xf32, #tpu.memory_space<vmem>>, vector<16x32xf32>,
    } else {
    }
    %c0 = arith.constant 0 : index
    %c0_1 = arith.constant 0 : index
    %3 = vector.load %arg8[%c0, %c0_1] : memref<16x32xf32, #tpu.memory_space<vmem>>, vector<16x32xf32>
    %c0_2 = arith.constant 0 : index
    %c0_3 = arith.constant 0 : index
    %4 = vector.load %arg3[%c0_2, %c0_3] : memref<16x128xbf16, #tpu.memory_space<vmem>>, vector<16x128xbf16>
    %c0_4 = arith.constant 0 : index
    %c0_5 = arith.constant 0 : index
    %5 = vector.load %arg4[%c0_4, %c0_5] : memref<128x32xbf16, #tpu.memory_space<vmem>>, vector<128x32xbf16>
    %cst = arith.constant dense<0.000000e+00> : vector<16x32xf32>
    %6 = tpu.matmul %4, %5, %cst {dimension_numbers = #tpu.dot_dimension_numbers<[1], [0], [0], [1], [0, 0, 1, 1], [], []>} : vector<16x128xbf16>, vector<128x32xbf16>, vector<16x32xf32> -> vector<16x32xf32>
    %7 = arith.addf %3, %6 : vector<16x32xf32>
    %c0_6 = arith.constant 0 : index
    %c0_7 = arith.constant 0 : index
    %8 = vector.load %arg8[%c0_6, %c0_7] : memref<16x32xf32, #tpu.memory_space<vmem>>, vector<16x32xf32>
    tpu.vector_store %arg8[%c0_6, %c0_7], %7 {strides = array<i32>} : memref<16x32xf32, #tpu.memory_space<vmem>>, vector<16x32xf32>,
    %c0_i32_8 = arith.constant 0 : i32
    %9 = arith.cmpi eq, %arg2, %c0_i32_8 : i32
    %10 = arith.extui %9 : i1 to i32
    %c0_i32_9 = arith.constant 0 : i32
    %11 = arith.cmpi ne, %10, %c0_i32_9 : i32
    scf.if %11 {
      %c0_10 = arith.constant 0 : index
      %c0_11 = arith.constant 0 : index
      %12 = vector.load %arg8[%c0_10, %c0_11] : memref<16x32xf32, #tpu.memory_space<vmem>>, vector<16x32xf32>
      %c0_12 = arith.constant 0 : index
      %c0_13 = arith.constant 0 : index
      %13 = vector.load %arg5[%c0_12, %c0_13] : memref<1x32xf32, #tpu.memory_space<vmem>>, vector<1x32xf32>
      %14 = vector.broadcast %13 : vector<1x32xf32> to vector<16x32xf32>
      %15 = arith.addf %12, %14 : vector<16x32xf32>
      %c0_14 = arith.constant 0 : index
      %c0_15 = arith.constant 0 : index
      %16 = vector.load %arg6[%c0_14, %c0_15] : memref<16x32xf32, #tpu.memory_space<vmem>>, vector<16x32xf32>
      %17 = arith.addf %15, %16 : vector<16x32xf32>
      %c0_16 = arith.constant 0 : index
      %c0_17 = arith.constant 0 : index
      %18 = vector.load %arg7[%c0_16, %c0_17] : memref<16x32xf32, #tpu.memory_space<vmem>>, vector<16x32xf32>
      tpu.vector_store %arg7[%c0_16, %c0_17], %17 {strides = array<i32>} : memref<16x32xf32, #tpu.memory_space<vmem>>, vector<16x32xf32>,
    } else {
    }
    return
  }
  func.func @transform_0(%arg0: i32, %arg1: i32, %arg2: i32) -> (i32, i32) {
    %c0_i32 = arith.constant 0 : i32
    return %arg0, %arg2 : i32, i32
  }
  func.func @transform_1(%arg0: i32, %arg1: i32, %arg2: i32) -> (i32, i32) {
    %c0_i32 = arith.constant 0 : i32
    return %arg2, %arg1 : i32, i32
  }
  func.func @transform_2(%arg0: i32, %arg1: i32, %arg2: i32) -> (i32, i32) {
    %c0_i32 = arith.constant 0 : i32
    %c0_i32_0 = arith.constant 0 : i32
    return %c0_i32, %arg1 : i32, i32
  }
  func.func @transform_3(%arg0: i32, %arg1: i32, %arg2: i32) -> (i32, i32) {
    %c0_i32 = arith.constant 0 : i32
    return %arg0, %arg1 : i32, i32
  }
  func.func @transform_4(%arg0: i32, %arg1: i32, %arg2: i32) -> (i32, i32) {
    %c0_i32 = arith.constant 0 : i32
    return %arg0, %arg1 : i32, i32
  }
}

module attributes {stable_mosaic.version = 11 : i64} {
  func.func @_attn_score_kernel(%arg0: i32, %arg1: i32, %arg2: memref<1x1x8x8xbf16, #tpu.memory_space<vmem>>, %arg3: memref<1x1x8x8xbf16, #tpu.memory_space<vmem>>, %arg4: memref<1x1x8x8xf32, #tpu.memory_space<vmem>>) attributes {dimension_semantics = [#tpu.dimension_semantics<parallel>, #tpu.dimension_semantics<parallel>], iteration_bounds = array<i64: 2, 4>, scalar_prefetch = 0 : i64, scratch_operands = 0 : i64, tpu.core_type = #tpu.core_type<tc>, window_params = [{transform_indices = @transform_0, window_bounds = array<i64: 1, 1, 8, 8>}, {transform_indices = @transform_1, window_bounds = array<i64: 1, 1, 8, 8>}, {transform_indices = @transform_2, window_bounds = array<i64: 1, 1, 8, 8>}]} {
    %c0 = arith.constant 0 : index
    %c0_0 = arith.constant 0 : index
    %c0_1 = arith.constant 0 : index
    %c0_2 = arith.constant 0 : index
    %0 = vector.load %arg2[%c0, %c0_0, %c0_1, %c0_2] : memref<1x1x8x8xbf16, #tpu.memory_space<vmem>>, vector<1x1x8x8xbf16>
    %1 = vector.shape_cast %0 : vector<1x1x8x8xbf16> to vector<8x8xbf16>
    %c0_3 = arith.constant 0 : index
    %c0_4 = arith.constant 0 : index
    %c0_5 = arith.constant 0 : index
    %c0_6 = arith.constant 0 : index
    %2 = vector.load %arg3[%c0_3, %c0_4, %c0_5, %c0_6] : memref<1x1x8x8xbf16, #tpu.memory_space<vmem>>, vector<1x1x8x8xbf16>
    %3 = vector.shape_cast %2 : vector<1x1x8x8xbf16> to vector<8x8xbf16>
    %cst = arith.constant dense<0.000000e+00> : vector<8x8xf32>
    %4 = tpu.matmul %1, %3, %cst {dimension_numbers = #tpu.dot_dimension_numbers<[1], [1], [0], [0], [0, 0, 1, 0], [], []>} : vector<8x8xbf16>, vector<8x8xbf16>, vector<8x8xf32> -> vector<8x8xf32>
    %cst_7 = arith.constant 0.353553385 : f32
    %5 = vector.broadcast %cst_7 : f32 to vector<8x8xf32>
    %6 = arith.mulf %4, %5 : vector<8x8xf32>
    %7 = tpu.iota {dimensions = array<i32: 1>} : vector<8x8xi32>
    %c5_i32 = arith.constant 5 : i32
    %8 = vector.broadcast %c5_i32 : i32 to vector<8x8xi32>
    %9 = arith.cmpi slt, %7, %8 : vector<8x8xi32>
    %cst_8 = arith.constant -1.000000e+30 : f32
    %10 = vector.broadcast %cst_8 : f32 to vector<8x8xf32>
    %11 = arith.select %9, %6, %10 : vector<8x8xi1>, vector<8x8xf32>
    %cst_9 = arith.constant dense<0xFF800000> : vector<8xf32>
    %12 = vector.multi_reduction <maximumf>, %11, %cst_9 [1] : vector<8x8xf32> to vector<8xf32>
    %13 = vector.shape_cast %12 : vector<8xf32> to vector<8x1xf32>
    %14 = vector.broadcast %13 : vector<8x1xf32> to vector<8x8xf32>
    %15 = arith.subf %11, %14 : vector<8x8xf32>
    %16 = math.exp %15 : vector<8x8xf32>
    %cst_10 = arith.constant dense<0.000000e+00> : vector<8xf32>
    %17 = vector.multi_reduction <add>, %16, %cst_10 [1] : vector<8x8xf32> to vector<8xf32>
    %18 = vector.shape_cast %17 : vector<8xf32> to vector<8x1xf32>
    %cst_11 = arith.constant 1.000000e+00 : f32
    %19 = vector.broadcast %cst_11 : f32 to vector<8x1xf32>
    %20 = arith.divf %19, %18 : vector<8x1xf32>
    %21 = vector.broadcast %20 : vector<8x1xf32> to vector<8x8xf32>
    %22 = arith.mulf %16, %21 : vector<8x8xf32>
    %c0_12 = arith.constant 0 : index
    %c0_13 = arith.constant 0 : index
    %c0_14 = arith.constant 0 : index
    %c0_15 = arith.constant 0 : index
    %23 = vector.load %arg4[%c0_12, %c0_13, %c0_14, %c0_15] : memref<1x1x8x8xf32, #tpu.memory_space<vmem>>, vector<1x1x8x8xf32>
    %24 = vector.shape_cast %23 : vector<1x1x8x8xf32> to vector<8x8xf32>
    %25 = vector.shape_cast %22 : vector<8x8xf32> to vector<1x1x8x8xf32>
    tpu.vector_store %arg4[%c0_12, %c0_13, %c0_14, %c0_15], %25 {strides = array<i32>} : memref<1x1x8x8xf32, #tpu.memory_space<vmem>>, vector<1x1x8x8xf32>,
    return
  }
  func.func @transform_0(%arg0: i32, %arg1: i32) -> (i32, i32, i32, i32) {
    %c0_i32 = arith.constant 0 : i32
    %c0_i32_0 = arith.constant 0 : i32
    %c0_i32_1 = arith.constant 0 : i32
    return %arg0, %arg1, %c0_i32, %c0_i32_0 : i32, i32, i32, i32
  }
  func.func @transform_1(%arg0: i32, %arg1: i32) -> (i32, i32, i32, i32) {
    %c0_i32 = arith.constant 0 : i32
    %c0_i32_0 = arith.constant 0 : i32
    %c0_i32_1 = arith.constant 0 : i32
    return %arg0, %arg1, %c0_i32, %c0_i32_0 : i32, i32, i32, i32
  }
  func.func @transform_2(%arg0: i32, %arg1: i32) -> (i32, i32, i32, i32) {
    %c0_i32 = arith.constant 0 : i32
    %c0_i32_0 = arith.constant 0 : i32
    %c0_i32_1 = arith.constant 0 : i32
    return %arg0, %arg1, %c0_i32, %c0_i32_0 : i32, i32, i32, i32
  }
}

</mosaic_0001>

<llo_original>
// kernel: _lambda_.9
$region0: #{_lambda_.9}
  #allocation0 [shape = 'u32[]', space=smem, size = 0x4, offset = 0x4, fixed_abs, tag = 'smem constant byte address 0x4 - core index']
  #allocation1 [shape = 'u32[144,128]{1,0:T(1,128)}', space=vmem, size = 0x12000, scoped, tag = 'internal scratch']
  #allocation2 [shape = 'bf16[16,32]{1,0:T(16,128)(2,1)}', space=vmem, size = 0x1000, scoped, tag = 'scratch operand']
  %s0 = inlined_call_operand.vmem [shape: f32[16,32], index: 0, kind: input, shape index: {}]
  %s1 = inlined_call_operand.vmem [shape: f32[1,32], index: 1, kind: input, shape index: {}]
  %s2 = inlined_call_operand.vmem [shape: f32[1,32], index: 2, kind: input, shape index: {}]
  %s3 = inlined_call_operand.vmem [shape: bf16[32,96], index: 3, kind: input, shape index: {}]
  %s4 = inlined_call_operand.vmem [shape: f32[1,96], index: 4, kind: input, shape index: {}]
  %s5 = inlined_call_operand.vmem [shape: bf16[16,96], index: 5, kind: output, shape index: {}]
  %s6 = sld [smem:[#allocation0]]
  $region34: #{_lambda_.9} parent=0
    _
  %s8 = ssub.s32 1, %s6
  %s9 = scalar_select 0, %s8, %s6
  // Predicated region
  $region2: #{_lambda_.9} parent=0 // pred_check
    _
  $region3: #{_lambda_.9} parent=0 // pred_check_branch
    %11 = sbr.rel (0) target = $region5
  $region4: #{_lambda_.9} parent=0 // pred_region
    _
  $region5: #{_lambda_.9} parent=0 // pred_fallthru
    _
  // Predicated region
  $region6: #{_lambda_.9} parent=0 // pred_check
    _
  $region7: #{_lambda_.9} parent=0 // pred_check_branch
    %13 = sbr.rel (0) target = $region9
  $region8: #{_lambda_.9} parent=0 // pred_region
    _
  $region9: #{_lambda_.9} parent=0 // pred_fallthru
    _
  // Predicated region
  $region10: #{_lambda_.9} parent=0 // pred_check
    _
  $region11: #{_lambda_.9} parent=0 // pred_check_branch
    %15 = sbr.rel (0) target = $region13
  $region12: #{_lambda_.9} parent=0 // pred_region
    _
  $region13: #{_lambda_.9} parent=0 // pred_fallthru
    _
  // Predicated region
  $region14: #{_lambda_.9} parent=0 // pred_check
    _
  $region15: #{_lambda_.9} parent=0 // pred_check_branch
    %17 = sbr.rel (0) target = $region17
  $region16: #{_lambda_.9} parent=0 // pred_region
    _
  $region17: #{_lambda_.9} parent=0 // pred_fallthru
    _
  // Predicated region
  $region18: #{_lambda_.9} parent=0 // pred_check
    _
  $region19: #{_lambda_.9} parent=0 // pred_check_branch
    %19 = sbr.rel (0) target = $region21
  $region20: #{_lambda_.9} parent=0 // pred_region
    _
  $region21: #{_lambda_.9} parent=0 // pred_fallthru
    _
  %p21 = scmp.eq.s32.totalorder 0, 0
  // Predicated region
  $region22: #{_lambda_.9} parent=0 // pred_check
    %p22 = pneg %p21
  $region23: #{_lambda_.9} parent=0 // pred_check_branch
    %24 = sbr.rel (%p22) target = $region25
  $region24: #{_lambda_.9} parent=0 // pred_region
    %v25 = vld [vmem:[%s0] sm:$0xff]
    %v26 = vld [vmem:[%s0 + $0x8] sm:$0xff]
    %vm27 = vcmask 261120
    %v28 = vsel %vm27, %v25, 0.0
    %29 = vadd.xlane.f32.xlu0 %v28
    %v30 = vpop.xlane.xlu0 %29
    %v31 = vsel %vm27, %v26, 0.0
    %32 = vadd.xlane.f32.xlu0 %v31
    %v33 = vpop.xlane.xlu0 %32
    %v34 = vrcp.pop 32.0
    %v35 = vmul.f32 %v30, %v34
    %v36 = vmul.f32 %v33, %v34
    %v37 = vsub.f32 %v25, %v35
    %v38 = vsub.f32 %v26, %v36
    %v39 = vmul.f32 %v37, %v37
    %v40 = vmul.f32 %v38, %v38
    %v41 = vsel %vm27, %v39, 0.0
    %42 = vadd.xlane.f32.xlu0 %v41
    %v43 = vpop.xlane.xlu0 %42
    %v44 = vsel %vm27, %v40, 0.0
    %45 = vadd.xlane.f32.xlu0 %v44
    %v46 = vpop.xlane.xlu0 %45
    %v47 = vmul.f32 %v43, %v34
    %v48 = vmul.f32 %v46, %v34
    %v49 = vadd.f32 %v47, 1e-05
    %v50 = vadd.f32 %v48, 1e-05
    %v51 = vrsqrt.pop %v49
    %v52 = vrsqrt.pop %v50
    %v53 = vmul.f32 %v37, %v51
    %v54 = vmul.f32 %v38, %v52
    %v55 = vld [vmem:[%s1] sm:$0x1]
    %v57 = vlaneseq
    %v58 = vshrl.u32 %v57, 7
    %v59 = vsub.s32 0, %v58
    %v60 = vrot.slane %v55, %v59
    %v62 = vmul.f32 %v53, %v60
    %v63 = vmul.f32 %v54, %v60
    %v64 = vld [vmem:[%s2] sm:$0x1]
    %v66 = vlaneseq
    %v67 = vshrl.u32 %v66, 7
    %v68 = vsub.s32 0, %v67
    %v69 = vrot.slane %v64, %v68
    %v71 = vadd.f32 %v62, %v69
    %v72 = vadd.f32 %v63, %v69
    %v73 = vpack.c.bf16 %v72, %v71
    %74 = vst.msk [vmem:[#allocation2] sm:$0xff] %vm27, %v73
  $region25: #{_lambda_.9} parent=0 // pred_fallthru
    _
  %v75 = vld [vmem:[#allocation2] sm:$0xff]
  %v76 = vld [vmem:[%s3] sm:$0xf]
  %v77 = vld [vmem:[%s3 + $0x4] sm:$0xf]
  %v78 = vld [vmem:[%s3 + $0x8] sm:$0xf]
  %v79 = vld [vmem:[%s3 + $0xc] sm:$0xf]
  %v80 = vld [vmem:[%s4] sm:$0x1]
  %v82 = vlaneseq
  %v83 = vshrl.u32 %v82, 7
  %v84 = vsub.s32 0, %v83
  %v85 = vrot.slane %v80, %v84
  %v91 = vunpack.c.l.b16 %v76
  %v92 = vunpack.c.l.b16 %v77
  %v93 = vunpack.c.l.b16 %v78
  %v94 = vunpack.c.l.b16 %v79
  %v95 = vpack.c.b16 %v92, %v91
  %v96 = vpack.c.b16 %v94, %v93
  %vm99 = vcmask 261120
  %v101 = vsel %vm99, %v75, 0
  %103 = vmatprep.subr.bf16.mxu0 0
  %104 = vmatpush1.bf16.msra.mxu0 %v95
  %105 = vmatprep.subr.bf16.mxu0 0
  %106 = vmatpush1.bf16.msra.mxu0 %v96
  %107 = vmatprep.subr.bf16.mxu0 0
  %108 = vmatpush1.bf16.msra.mxu0 0
  %109 = vmatprep.subr.bf16.mxu0 0
  %110 = vmatpush1.bf16.msra.mxu0 0
  %111 = vmatprep.subr.bf16.mxu0 0
  %112 = vmatpush1.bf16.msra.mxu0 0
  %113 = vmatprep.subr.bf16.mxu0 0
  %114 = vmatpush1.bf16.msra.mxu0 0
  %115 = vmatprep.subr.bf16.mxu0 0
  %116 = vmatpush1.bf16.msra.mxu0 0
  %117 = vmatprep.subr.bf16.mxu0 0
  %118 = vmatpush1.bf16.msra.mxu0 0
  %119 = vmatprep.subr.bf16.mxu0 0
  %120 = vmatpush1.bf16.msra.mxu0 0
  %121 = vmatprep.subr.bf16.mxu0 0
  %122 = vmatpush1.bf16.msra.mxu0 0
  %123 = vmatprep.subr.bf16.mxu0 0
  %124 = vmatpush1.bf16.msra.mxu0 0
  %125 = vmatprep.subr.bf16.mxu0 0
  %126 = vmatpush1.bf16.msra.mxu0 0
  %127 = vmatprep.subr.bf16.mxu0 0
  %128 = vmatpush1.bf16.msra.mxu0 0
  %129 = vmatprep.subr.bf16.mxu0 0
  %130 = vmatpush1.bf16.msra.mxu0 0
  %131 = vmatprep.subr.bf16.mxu0 0
  %132 = vmatpush1.bf16.msra.mxu0 0
  %133 = vmatprep.subr.bf16.mxu0 0
  %134 = vmatpush1.bf16.msra.mxu0 0
  %135 = vmatprep.mubr.bf16.mxu0 0
  %136 = vmatmul.mubr.bf16.gmra.mrb[0].mxu0 %v101
  %v137 = vpop.f32.mrb[0].mxu0
  %v138 = vadd.f32 %v85, %v137
  %v139 = vpop.f32.mrb[0].mxu0
  %v140 = vpop.f32.mrb[0].mxu0
  %v141 = vadd.f32 %v85, %v140
  %v142 = vpop.f32.mrb[0].mxu0
  %143 = vdwg.mxu0
  %v144 = vpack.c.bf16 %v141, %v138
  %v146 = vunpack.c.l.b16 %v144
  %v147 = vunpack.c.h.b16 %v144
  %v148 = vpack.c.b16 %v146, %v146
  %v149 = vpack.c.b16 %v147, %v147
  %vm152 = vcmask 781312
  %153 = vst.msk [vmem:[%s5] sm:$0xf] %vm152, %v148
  %154 = vst.msk [vmem:[%s5 + $0x4] sm:$0xf] %vm152, %v149
  // Predicated region
  $region26: #{_lambda_.9} parent=0 // pred_check
    _
  $region27: #{_lambda_.9} parent=0 // pred_check_branch
    %156 = sbr.rel (0) target = $region29
  $region28: #{_lambda_.9} parent=0 // pred_region
    _
  $region29: #{_lambda_.9} parent=0 // pred_fallthru
    _
  // Predicated region
  $region30: #{_lambda_.9} parent=0 // pred_check
    _
  $region31: #{_lambda_.9} parent=0 // pred_check_branch
    %158 = sbr.rel (0) target = $region33
  $region32: #{_lambda_.9} parent=0 // pred_region
    _
  $region33: #{_lambda_.9} parent=0 // pred_fallthru
    _

// kernel: _lambda_.8
$region0: #{_lambda_.8}
  #allocation0 [shape = 'u32[]', space=smem, size = 0x4, offset = 0x4, fixed_abs, tag = 'smem constant byte address 0x4 - core index']
  #allocation1 [shape = 'u32[144,128]{1,0:T(1,128)}', space=vmem, size = 0x12000, scoped, tag = 'internal scratch']
  #allocation2 [shape = 'f32[8,32]{1,0:T(8,128)}', space=vmem, size = 0x1000, scoped, tag = 'scratch operand']
  %s0 = inlined_call_operand.vmem [shape: f32[8,192], index: 0, kind: input, shape index: {}]
  %s1 = inlined_call_operand.vmem [shape: bf16[192,32], index: 1, kind: input, shape index: {}]
  %s2 = inlined_call_operand.vmem [shape: f32[1,32], index: 2, kind: input, shape index: {}]
  %s3 = inlined_call_operand.vmem [shape: f32[8,32], index: 3, kind: output, shape index: {}]
  %s4 = sld [smem:[#allocation0]]
  $region30: #{_lambda_.8} parent=0
    _
  %s6 = ssub.s32 1, %s4
  %s7 = scalar_select 0, %s6, %s4
  // Predicated region
  $region2: #{_lambda_.8} parent=0 // pred_check
    _
  $region3: #{_lambda_.8} parent=0 // pred_check_branch
    %9 = sbr.rel (0) target = $region5
  $region4: #{_lambda_.8} parent=0 // pred_region
    _
  $region5: #{_lambda_.8} parent=0 // pred_fallthru
    _
  // Predicated region
  $region6: #{_lambda_.8} parent=0 // pred_check
    _
  $region7: #{_lambda_.8} parent=0 // pred_check_branch
    %11 = sbr.rel (0) target = $region9
  $region8: #{_lambda_.8} parent=0 // pred_region
    _
  $region9: #{_lambda_.8} parent=0 // pred_fallthru
    _
  // Predicated region
  $region10: #{_lambda_.8} parent=0 // pred_check
    _
  $region11: #{_lambda_.8} parent=0 // pred_check_branch
    %13 = sbr.rel (0) target = $region13
  $region12: #{_lambda_.8} parent=0 // pred_region
    _
  $region13: #{_lambda_.8} parent=0 // pred_fallthru
    _
  %p15 = scmp.eq.s32.totalorder 0, 0
  // Predicated region
  $region14: #{_lambda_.8} parent=0 // pred_check
    %p16 = pneg %p15
  $region15: #{_lambda_.8} parent=0 // pred_check_branch
    %18 = sbr.rel (%p16) target = $region17
  $region16: #{_lambda_.8} parent=0 // pred_region
    %vm19 = vcmask 261120
    %20 = vst.msk [vmem:[#allocation2] sm:$0xff] %vm19, 0.0
  $region17: #{_lambda_.8} parent=0 // pred_fallthru
    _
  %v21 = vld [vmem:[#allocation2] sm:$0xff]
  %v22 = vld [vmem:[%s0] sm:$0xff]
  %v23 = vld [vmem:[%s0 + $0x8] sm:$0xff]
  %v24 = vpack.c.bf16 %v22, %v22
  %v25 = vpack.c.bf16 %v23, %v23
  %v26 = vld [vmem:[%s1] sm:$0xf]
  %v27 = vld [vmem:[%s1 + $0x4] sm:$0xf]
  %v28 = vld [vmem:[%s1 + $0x8] sm:$0xf]
  %v29 = vld [vmem:[%s1 + $0xc] sm:$0xf]
  %v30 = vld [vmem:[%s1 + $0x10] sm:$0xf]
  %v31 = vld [vmem:[%s1 + $0x14] sm:$0xf]
  %v32 = vld [vmem:[%s1 + $0x18] sm:$0xf]
  %v33 = vld [vmem:[%s1 + $0x1c] sm:$0xf]
  %v34 = vld [vmem:[%s1 + $0x20] sm:$0xf]
  %v35 = vld [vmem:[%s1 + $0x24] sm:$0xf]
  %v36 = vld [vmem:[%s1 + $0x28] sm:$0xf]
  %v37 = vld [vmem:[%s1 + $0x2c] sm:$0xf]
  %v38 = vld [vmem:[%s1 + $0x30] sm:$0xf]
  %v39 = vld [vmem:[%s1 + $0x34] sm:$0xf]
  %v40 = vld [vmem:[%s1 + $0x38] sm:$0xf]
  %v41 = vld [vmem:[%s1 + $0x3c] sm:$0xf]
  %v42 = vld [vmem:[%s1 + $0x40] sm:$0xf]
  %v43 = vld [vmem:[%s1 + $0x44] sm:$0xf]
  %v44 = vld [vmem:[%s1 + $0x48] sm:$0xf]
  %v45 = vld [vmem:[%s1 + $0x4c] sm:$0xf]
  %v46 = vld [vmem:[%s1 + $0x50] sm:$0xf]
  %v47 = vld [vmem:[%s1 + $0x54] sm:$0xf]
  %v48 = vld [vmem:[%s1 + $0x58] sm:$0xf]
  %v49 = vld [vmem:[%s1 + $0x5c] sm:$0xf]
  %v74 = vunpack.c.l.b16 %v26
  %v75 = vunpack.c.l.b16 %v27
  %v76 = vunpack.c.l.b16 %v28
  %v77 = vunpack.c.l.b16 %v29
  %v78 = vunpack.c.l.b16 %v30
  %v79 = vunpack.c.l.b16 %v31
  %v80 = vunpack.c.l.b16 %v32
  %v81 = vunpack.c.l.b16 %v33
  %v82 = vunpack.c.l.b16 %v34
  %v83 = vunpack.c.l.b16 %v35
  %v84 = vunpack.c.l.b16 %v36
  %v85 = vunpack.c.l.b16 %v37
  %v86 = vunpack.c.l.b16 %v38
  %v87 = vunpack.c.l.b16 %v39
  %v88 = vunpack.c.l.b16 %v40
  %v89 = vunpack.c.l.b16 %v41
  %v90 = vunpack.c.l.b16 %v42
  %v91 = vunpack.c.l.b16 %v43
  %v92 = vunpack.c.l.b16 %v44
  %v93 = vunpack.c.l.b16 %v45
  %v94 = vunpack.c.l.b16 %v46
  %v95 = vunpack.c.l.b16 %v47
  %v96 = vunpack.c.l.b16 %v48
  %v97 = vunpack.c.l.b16 %v49
  %v98 = vpack.c.b16 %v75, %v74
  %v99 = vpack.c.b16 %v77, %v76
  %v100 = vpack.c.b16 %v79, %v78
  %v101 = vpack.c.b16 %v81, %v80
  %v102 = vpack.c.b16 %v83, %v82
  %v103 = vpack.c.b16 %v85, %v84
  %v104 = vpack.c.b16 %v87, %v86
  %v105 = vpack.c.b16 %v89, %v88
  %v106 = vpack.c.b16 %v91, %v90
  %v107 = vpack.c.b16 %v93, %v92
  %v108 = vpack.c.b16 %v95, %v94
  %v109 = vpack.c.b16 %v97, %v96
  %vm122 = vcmask 523264
  %v124 = vsel %vm122, %v25, 0
  %126 = vmatprep.subr.bf16.mxu0 0
  %127 = vmatpush1.bf16.msra.mxu0 %v98
  %128 = vmatprep.subr.bf16.mxu0 0
  %129 = vmatpush1.bf16.msra.mxu0 %v99
  %130 = vmatprep.subr.bf16.mxu0 0
  %131 = vmatpush1.bf16.msra.mxu0 %v100
  %132 = vmatprep.subr.bf16.mxu0 0
  %133 = vmatpush1.bf16.msra.mxu0 %v101
  %134 = vmatprep.subr.bf16.mxu0 0
  %135 = vmatpush1.bf16.msra.mxu0 %v102
  %136 = vmatprep.subr.bf16.mxu0 0
  %137 = vmatpush1.bf16.msra.mxu0 %v103
  %138 = vmatprep.subr.bf16.mxu0 0
  %139 = vmatpush1.bf16.msra.mxu0 %v104
  %140 = vmatprep.subr.bf16.mxu0 0
  %141 = vmatpush1.bf16.msra.mxu0 %v105
  %142 = vmatprep.subr.bf16.mxu0 0
  %143 = vmatpush1.bf16.msra.mxu0 %v106
  %144 = vmatprep.subr.bf16.mxu0 0
  %145 = vmatpush1.bf16.msra.mxu0 %v107
  %146 = vmatprep.subr.bf16.mxu0 0
  %147 = vmatpush1.bf16.msra.mxu0 %v108
  %148 = vmatprep.subr.bf16.mxu0 0
  %149 = vmatpush1.bf16.msra.mxu0 %v109
  %150 = vmatprep.subr.bf16.mxu0 0
  %151 = vmatpush1.bf16.msra.mxu0 0
  %152 = vmatprep.subr.bf16.mxu0 0
  %153 = vmatpush1.bf16.msra.mxu0 0
  %154 = vmatprep.subr.bf16.mxu0 0
  %155 = vmatpush1.bf16.msra.mxu0 0
  %156 = vmatprep.subr.bf16.mxu0 0
  %157 = vmatpush1.bf16.msra.mxu0 0
  %158 = vmatprep.mubr.bf16.mxu0 %v124
  %159 = vmatmul.mubr.bf16.gmra.mrb[0].mxu0 %v24
  %v160 = vpop.f32.mrb[0].mxu0
  %v161 = vadd.f32 0.0, %v160
  %v162 = vpop.f32.mrb[0].mxu0
  %v163 = vpop.f32.mrb[0].mxu0
  %v164 = vpop.f32.mrb[0].mxu0
  %165 = vdwg.mxu0
  %v166 = vadd.f32 %v21, %v161
  %vm167 = vcmask 261120
  %168 = vst.msk [vmem:[#allocation2] sm:$0xff] %vm167, %v166
  // Predicated region
  $region18: #{_lambda_.8} parent=0 // pred_check
    %p169 = pneg %p15
  $region19: #{_lambda_.8} parent=0 // pred_check_branch
    %171 = sbr.rel (%p169) target = $region21
  $region20: #{_lambda_.8} parent=0 // pred_region
    %v172 = vld [vmem:[#allocation2] sm:$0xff]
    %v173 = vld [vmem:[%s2] sm:$0x1]
    %v175 = vlaneseq
    %v176 = vshrl.u32 %v175, 7
    %v177 = vsub.s32 0, %v176
    %v178 = vrot.slane %v173, %v177
    %v180 = vadd.f32 %v172, %v178
    %181 = vst.msk [vmem:[%s3] sm:$0xff] %vm167, %v180
  $region21: #{_lambda_.8} parent=0 // pred_fallthru
    _
  // Predicated region
  $region22: #{_lambda_.8} parent=0 // pred_check
    _
  $region23: #{_lambda_.8} parent=0 // pred_check_branch
    %183 = sbr.rel (0) target = $region25
  $region24: #{_lambda_.8} parent=0 // pred_region
    _
  $region25: #{_lambda_.8} parent=0 // pred_fallthru
    _
  // Predicated region
  $region26: #{_lambda_.8} parent=0 // pred_check
    _
  $region27: #{_lambda_.8} parent=0 // pred_check_branch
    %185 = sbr.rel (0) target = $region29
  $region28: #{_lambda_.8} parent=0 // pred_region
    _
  $region29: #{_lambda_.8} parent=0 // pred_fallthru
    _

// kernel: _lambda_.10
$region0: #{_lambda_.10}
  #allocation0 [shape = 'u32[]', space=smem, size = 0x4, offset = 0x4, fixed_abs, tag = 'smem constant byte address 0x4 - core index']
  #allocation1 [shape = 'u32[144,128]{1,0:T(1,128)}', space=vmem, size = 0x12000, scoped, tag = 'internal scratch']
  %s0 = inlined_call_operand.vmem [shape: bf16[2,4,8,8], index: 0, kind: input, shape index: {}]
  %s1 = inlined_call_operand.vmem [shape: bf16[2,4,8,8], index: 1, kind: input, shape index: {}]
  %s2 = inlined_call_operand.vmem [shape: bf16[2,4,8,8], index: 2, kind: input, shape index: {}]
  %s3 = inlined_call_operand.vmem [shape: bf16[2,4,8,8], index: 3, kind: output, shape index: {}]
  %s4 = sld [smem:[#allocation0]]
  $region45: #{_lambda_.10} parent=0
    _
  %s6 = ssub.s32 1, %s4
  %s7 = scalar_select 0, %s6, %s4
  loop: start=0, step=1, limit=10
  $region2: #{_lambda_.10} parent=0 // loop_pre_header
    _
  $region3: #{_lambda_.10} parent=0 // loop_header
    %s9 = sphi 0, %s13
    %p10 = scmp.ge.s32.totalorder %s9, 10
    %s16 = sphi 0, %s28
    %s17 = sphi 0, %s24
    %s18 = sphi 0, %s16
    %s19 = sphi 0, %s17
    %s20 = sphi 0, %s18
    %s21 = sphi 0, %s19
    %s33 = sphi 0, %s35
    %s36 = sphi 0, %s33
    %s37 = sphi 0, %s36
    %s53 = sphi 0, %s37
    %s61 = sphi 0, %s63
    %s64 = sphi 0, %s61
    %s65 = sphi 0, %s64
    %s81 = sphi 0, %s65
    %s89 = sphi 0, %s91
    %s92 = sphi 0, %s89
    %s93 = sphi 0, %s92
    %s109 = sphi 0, %s93
    %s117 = sphi 0, %s119
    %s120 = sphi 0, %s117
    %s121 = sphi 0, %s120
    %s137 = sphi 0, %s121
  $region4: #{_lambda_.10} parent=0 // loop_header_branch
    %12 = sbr.rel (%p10) target = $region8
  $region5: #{_lambda_.10} parent=0 // loop_body
    %s14 = ssub.s32 %s9, 1
    %s15 = ssub.s32 %s9, 2
    %s22 = sadd.s32 1, %s17
    %p23 = scmp.ge.s32.totalorder %s22, 4
    %s24 = scalar_select %p23, 0, %s22
    %s25 = sadd.s32 1, %s16
    %s26 = scalar_select %p23, %s25, %s16
    %p27 = scmp.ge.s32.totalorder %s26, 2
    %s28 = scalar_select %p27, 0, %s26
    %s29 = ssub.s32 %s16, %s28
    %s30 = ssub.s32 %s17, %s24
    %s31 = sor.u32 %s29, %s30
    %p32 = scmp.eq.s32.totalorder %s31, 0
    %s34 = sadd.s32 %s33, 1
    %s35 = scalar_select %p32, %s33, %s34
    %p38 = pneg %p32
    %p39 = scmp.eq.s32.totalorder %s9, 7
    %p40 = por %p38, %p39
    %p41 = scmp.ne.s32.totalorder %s33, %s36
    %p42 = scmp.eq.s32.totalorder %s9, 0
    %p43 = por %p41, %p42
    %p44 = scmp.ne.s32.totalorder %s33, %s36
    %p45 = scmp.eq.s32.totalorder %s14, 7
    %p46 = por %p44, %p45
    %p47 = scmp.ne.s32.totalorder %s36, %s37
    %p48 = scmp.eq.s32.totalorder %s14, 0
    %p49 = por %p47, %p48
    %p50 = scmp.ne.s32.totalorder %s36, %s37
    %p51 = scmp.eq.s32.totalorder %s15, 7
    %p52 = por %p50, %p51
    %p54 = scmp.ne.s32.totalorder %s37, %s53
    %p55 = scmp.eq.s32.totalorder %s15, 0
    %p56 = por %p54, %p55
    %s57 = ssub.s32 %s16, %s28
    %s58 = ssub.s32 %s17, %s24
    %s59 = sor.u32 %s57, %s58
    %p60 = scmp.eq.s32.totalorder %s59, 0
    %s62 = sadd.s32 %s61, 1
    %s63 = scalar_select %p60, %s61, %s62
    %p66 = pneg %p60
    %p67 = scmp.eq.s32.totalorder %s9, 7
    %p68 = por %p66, %p67
    %p69 = scmp.ne.s32.totalorder %s61, %s64
    %p70 = scmp.eq.s32.totalorder %s9, 0
    %p71 = por %p69, %p70
    %p72 = scmp.ne.s32.totalorder %s61, %s64
    %p73 = scmp.eq.s32.totalorder %s14, 7
    %p74 = por %p72, %p73
    %p75 = scmp.ne.s32.totalorder %s64, %s65
    %p76 = scmp.eq.s32.totalorder %s14, 0
    %p77 = por %p75, %p76
    %p78 = scmp.ne.s32.totalorder %s64, %s65
    %p79 = scmp.eq.s32.totalorder %s15, 7
    %p80 = por %p78, %p79
    %p82 = scmp.ne.s32.totalorder %s65, %s81
    %p83 = scmp.eq.s32.totalorder %s15, 0
    %p84 = por %p82, %p83
    %s85 = ssub.s32 %s16, %s28
    %s86 = ssub.s32 %s17, %s24
    %s87 = sor.u32 %s85, %s86
    %p88 = scmp.eq.s32.totalorder %s87, 0
    %s90 = sadd.s32 %s89, 1
    %s91 = scalar_select %p88, %s89, %s90
    %p94 = pneg %p88
    %p95 = scmp.eq.s32.totalorder %s9, 7
    %p96 = por %p94, %p95
    %p97 = scmp.ne.s32.totalorder %s89, %s92
    %p98 = scmp.eq.s32.totalorder %s9, 0
    %p99 = por %p97, %p98
    %p100 = scmp.ne.s32.totalorder %s89, %s92
    %p101 = scmp.eq.s32.totalorder %s14, 7
    %p102 = por %p100, %p101
    %p103 = scmp.ne.s32.totalorder %s92, %s93
    %p104 = scmp.eq.s32.totalorder %s14, 0
    %p105 = por %p103, %p104
    %p106 = scmp.ne.s32.totalorder %s92, %s93
    %p107 = scmp.eq.s32.totalorder %s15, 7
    %p108 = por %p106, %p107
    %p110 = scmp.ne.s32.totalorder %s93, %s109
    %p111 = scmp.eq.s32.totalorder %s15, 0
    %p112 = por %p110, %p111
    %s113 = ssub.s32 %s16, %s28
    %s114 = ssub.s32 %s17, %s24
    %s115 = sor.u32 %s113, %s114
    %p116 = scmp.eq.s32.totalorder %s115, 0
    %s118 = sadd.s32 %s117, 1
    %s119 = scalar_select %p116, %s117, %s118
    %p122 = pneg %p116
    %p123 = scmp.eq.s32.totalorder %s9, 7
    %p124 = por %p122, %p123
    %p125 = scmp.ne.s32.totalorder %s117, %s120
    %p126 = scmp.eq.s32.totalorder %s9, 0
    %p127 = por %p125, %p126
    %p128 = scmp.ne.s32.totalorder %s117, %s120
    %p129 = scmp.eq.s32.totalorder %s14, 7
    %p130 = por %p128, %p129
    %p131 = scmp.ne.s32.totalorder %s120, %s121
    %p132 = scmp.eq.s32.totalorder %s14, 0
    %p133 = por %p131, %p132
    %p134 = scmp.ne.s32.totalorder %s120, %s121
    %p135 = scmp.eq.s32.totalorder %s15, 7
    %p136 = por %p134, %p135
    %p138 = scmp.ne.s32.totalorder %s121, %s137
    %p139 = scmp.eq.s32.totalorder %s15, 0
    %p140 = por %p138, %p139
    %p141 = scmp.le.s32.totalorder 1, %s9
    %p142 = scmp.lt.s32.totalorder %s9, 9
    %p143 = pnand %p141, %p142
    %p144 = pneg %p143
    // Predicated region
    $region9: #{_lambda_.10} parent=5 // pred_check
      _
    $region10: #{_lambda_.10} parent=5 // pred_check_branch
      %146 = sbr.rel (%p143) target = $region12
    $region11: #{_lambda_.10} parent=5 // pred_region
      %s147 = ssub.s32 %s9, 1
    $region12: #{_lambda_.10} parent=5 // pred_fallthru
      _
    %p148 = scmp.lt.s32.totalorder %s9, 8
    // Predicated region
    $region13: #{_lambda_.10} parent=5 // pred_check
      %p149 = pneg %p148
    $region14: #{_lambda_.10} parent=5 // pred_check_branch
      %151 = sbr.rel (%p149) target = $region16
    $region15: #{_lambda_.10} parent=5 // pred_region
      // Predicated region
      $region17: #{_lambda_.10} parent=15 // pred_check
        %p152 = pneg %p43
      $region18: #{_lambda_.10} parent=15 // pred_check_branch
        %154 = sbr.rel (%p152) target = $region20
      $region19: #{_lambda_.10} parent=15 // pred_region
        %p155 = scmp.lt.s32.totalorder %s16, 1
        %s156 = scalar_select %p155, %s16, 1
        %p157 = scmp.lt.s32.totalorder %s17, 3
        %s158 = scalar_select %p157, %s17, 3
        %s159 = smul.addr %s156, 4
        %s160 = sadd.s32 %s158, %s159
        %s161 = smul.addr %s160, 4
        %s162 = scalar_lea.vmem %s0, %s161
      $region20: #{_lambda_.10} parent=15 // pred_fallthru
        _
      // Predicated region
      $region21: #{_lambda_.10} parent=15 // pred_check
        %p163 = pneg %p71
      $region22: #{_lambda_.10} parent=15 // pred_check_branch
        %165 = sbr.rel (%p163) target = $region24
      $region23: #{_lambda_.10} parent=15 // pred_region
        %p166 = scmp.lt.s32.totalorder %s16, 1
        %s167 = scalar_select %p166, %s16, 1
        %p168 = scmp.lt.s32.totalorder %s17, 3
        %s169 = scalar_select %p168, %s17, 3
        %s170 = smul.addr %s167, 4
        %s171 = sadd.s32 %s169, %s170
        %s172 = smul.addr %s171, 4
        %s173 = scalar_lea.vmem %s1, %s172
      $region24: #{_lambda_.10} parent=15 // pred_fallthru
        _
      // Predicated region
      $region25: #{_lambda_.10} parent=15 // pred_check
        %p174 = pneg %p99
      $region26: #{_lambda_.10} parent=15 // pred_check_branch
        %176 = sbr.rel (%p174) target = $region28
      $region27: #{_lambda_.10} parent=15 // pred_region
        %p177 = scmp.lt.s32.totalorder %s16, 1
        %s178 = scalar_select %p177, %s16, 1
        %p179 = scmp.lt.s32.totalorder %s17, 3
        %s180 = scalar_select %p179, %s17, 3
        %s181 = smul.addr %s178, 4
        %s182 = sadd.s32 %s180, %s181
        %s183 = smul.addr %s182, 4
        %s184 = scalar_lea.vmem %s2, %s183
      $region28: #{_lambda_.10} parent=15 // pred_fallthru
        _
    $region16: #{_lambda_.10} parent=5 // pred_fallthru
      _
    %p185 = scmp.le.s32.totalorder 1, %s9
    %p186 = scmp.lt.s32.totalorder %s9, 9
    %p187 = pnand %p185, %p186
    %p188 = pneg %p187
    // Predicated region
    $region29: #{_lambda_.10} parent=5 // pred_check
      _
    $region30: #{_lambda_.10} parent=5 // pred_check_branch
      %190 = sbr.rel (%p187) target = $region32
    $region31: #{_lambda_.10} parent=5 // pred_region
      %s191 = ssub.s32 %s9, 1
      %p192 = scmp.lt.s32.totalorder %s18, 1
      %s193 = scalar_select %p192, %s18, 1
      %p194 = scmp.lt.s32.totalorder %s19, 3
      %s195 = scalar_select %p194, %s19, 3
      %s196 = smul.addr %s193, 4
      %s197 = sadd.s32 %s195, %s196
      %s198 = smul.addr %s197, 4
      %s199 = scalar_lea.vmem %s0, %s198
      %p200 = pneg %p49
      %p201 = pneg %p46
      %p202 = scmp.lt.s32.totalorder %s18, 1
      %s203 = scalar_select %p202, %s18, 1
      %p204 = scmp.lt.s32.totalorder %s19, 3
      %s205 = scalar_select %p204, %s19, 3
      %s206 = smul.addr %s203, 4
      %s207 = sadd.s32 %s205, %s206
      %s208 = smul.addr %s207, 4
      %s209 = scalar_lea.vmem %s1, %s208
      %p210 = pneg %p77
      %p211 = pneg %p74
      %p212 = scmp.lt.s32.totalorder %s18, 1
      %s213 = scalar_select %p212, %s18, 1
      %p214 = scmp.lt.s32.totalorder %s19, 3
      %s215 = scalar_select %p214, %s19, 3
      %s216 = smul.addr %s213, 4
      %s217 = sadd.s32 %s215, %s216
      %s218 = smul.addr %s217, 4
      %s219 = scalar_lea.vmem %s2, %s218
      %p220 = pneg %p105
      %p221 = pneg %p102
      %p222 = pneg %p133
      %p223 = pneg %p130
      %p224 = scmp.lt.s32.totalorder %s18, 1
      %s225 = scalar_select %p224, %s18, 1
      %p226 = scmp.lt.s32.totalorder %s19, 3
      %s227 = scalar_select %p226, %s19, 3
      %s228 = smul.addr %s225, 4
      %s229 = sadd.s32 %s227, %s228
      %s230 = smul.addr %s229, 4
      %s231 = scalar_lea.vmem %s3, %s230
      %p232 = scmp.lt.s32.totalorder %s18, 1
      %s233 = scalar_select %p232, %s18, 1
      %p234 = scmp.lt.s32.totalorder %s19, 3
      %s235 = scalar_select %p234, %s19, 3
      %s236 = smul.addr %s233, 4
      %s237 = sadd.s32 %s235, %s236
      %s238 = smul.addr %s237, 4
      %s239 = scalar_lea.vmem %s0, %s238
      %p240 = scmp.lt.s32.totalorder %s18, 1
      %s241 = scalar_select %p240, %s18, 1
      %p242 = scmp.lt.s32.totalorder %s19, 3
      %s243 = scalar_select %p242, %s19, 3
      %s244 = smul.addr %s241, 4
      %s245 = sadd.s32 %s243, %s244
      %s246 = smul.addr %s245, 4
      %s247 = scalar_lea.vmem %s1, %s246
      %p248 = scmp.lt.s32.totalorder %s18, 1
      %s249 = scalar_select %p248, %s18, 1
      %p250 = scmp.lt.s32.totalorder %s19, 3
      %s251 = scalar_select %p250, %s19, 3
      %s252 = smul.addr %s249, 4
      %s253 = sadd.s32 %s251, %s252
      %s254 = smul.addr %s253, 4
      %s255 = scalar_lea.vmem %s2, %s254
      %p256 = scmp.lt.s32.totalorder %s18, 1
      %s257 = scalar_select %p256, %s18, 1
      %p258 = scmp.lt.s32.totalorder %s19, 3
      %s259 = scalar_select %p258, %s19, 3
      %s260 = smul.addr %s257, 4
      %s261 = sadd.s32 %s259, %s260
      %s262 = smul.addr %s261, 4
      %s263 = scalar_lea.vmem %s3, %s262
      %v265 = vld [vmem:[%s239] sm:$0xf]
      %v266 = vld [vmem:[%s247] sm:$0xf]
      %v267 = vld [vmem:[%s255] sm:$0xf]
      %vm268 = vcmask 64512
      %v270 = vsel %vm268, %v265, 0
      %v273 = vsel %vm268, %v266, 0
      %275 = vmatprep.subr.bf16.mxu0 0
      %276 = vmatpush1.bf16.xpose.msra.mxu0 %v273
      %277 = vmatprep.subr.bf16.mxu0 0
      %278 = vmatpush1.bf16.xpose.msra.mxu0 0
      %279 = vmatprep.subr.bf16.mxu0 0
      %280 = vmatpush1.bf16.xpose.msra.mxu0 0
      %281 = vmatprep.subr.bf16.mxu0 0
      %282 = vmatpush1.bf16.xpose.msra.mxu0 0
      %283 = vmatprep.subr.bf16.mxu0 0
      %284 = vmatpush1.bf16.xpose.msra.mxu0 0
      %285 = vmatprep.subr.bf16.mxu0 0
      %286 = vmatpush1.bf16.xpose.msra.mxu0 0
      %287 = vmatprep.subr.bf16.mxu0 0
      %288 = vmatpush1.bf16.xpose.msra.mxu0 0
      %289 = vmatprep.subr.bf16.mxu0 0
      %290 = vmatpush1.bf16.xpose.msra.mxu0 0
      %291 = vmatprep.subr.bf16.mxu0 0
      %292 = vmatpush1.bf16.xpose.msra.mxu0 0
      %293 = vmatprep.subr.bf16.mxu0 0
      %294 = vmatpush1.bf16.xpose.msra.mxu0 0
      %295 = vmatprep.subr.bf16.mxu0 0
      %296 = vmatpush1.bf16.xpose.msra.mxu0 0
      %297 = vmatprep.subr.bf16.mxu0 0
      %298 = vmatpush1.bf16.xpose.msra.mxu0 0
      %299 = vmatprep.subr.bf16.mxu0 0
      %300 = vmatpush1.bf16.xpose.msra.mxu0 0
      %301 = vmatprep.subr.bf16.mxu0 0
      %302 = vmatpush1.bf16.xpose.msra.mxu0 0
      %303 = vmatprep.subr.bf16.mxu0 0
      %304 = vmatpush1.bf16.xpose.msra.mxu0 0
      %305 = vmatprep.subr.bf16.mxu0 0
      %306 = vmatpush1.bf16.xpose.msra.mxu0 0
      %307 = vmatprep.mubr.bf16.mxu0 0
      %308 = vmatmul.mubr.bf16.gmra.mrb[0].mxu0 %v270
      %v309 = vpop.f32.mrb[0].mxu0
      %v310 = vadd.f32 0.0, %v309
      %v311 = vpop.f32.mrb[0].mxu0
      %v312 = vpop.f32.mrb[0].mxu0
      %v313 = vpop.f32.mrb[0].mxu0
      %314 = vdwg.mxu0
      %v315 = vmul.f32 %v310, 0.35355338
      %v316 = vlaneseq
      %v317 = vand.u32 %v316, 127
      %vm318 = vcmp.lt.s32.totalorder %v317, 5
      %v319 = vsel %vm318, %v315, -1e+30
      %v320 = vsel %vm268, %v319, -inf
      %321 = vmax.xlane.f32.xlu0 %v320
      %v322 = vpop.xlane.xlu0 %321
      %v323 = vsub.f32 %v319, %v322
      %v324 = vmul.f32 %v323, 1.442695
      %v325 = vpow.pop %v324
      %v326 = vsel %vm268, %v325, 0.0
      %327 = vadd.xlane.f32.xlu0 %v326
      %v328 = vpop.xlane.xlu0 %327
      %v329 = vrcp.pop %v328
      %v330 = vmul.f32 1.0, %v329
      %v331 = vmul.f32 %v325, %v330
      %v332 = vpack.c.bf16 %v331, %v331
      %v334 = vsel %vm268, %v332, 0
      %vm336 = vcmask 1043456
      %v338 = vsel %vm336, %v267, 0
      %340 = vmatprep.subr.bf16.mxu0 0
      %341 = vmatpush1.bf16.msra.mxu0 %v338
      %342 = vmatprep.subr.bf16.mxu0 0
      %343 = vmatpush1.bf16.msra.mxu0 0
      %344 = vmatprep.subr.bf16.mxu0 0
      %345 = vmatpush1.bf16.msra.mxu0 0
      %346 = vmatprep.subr.bf16.mxu0 0
      %347 = vmatpush1.bf16.msra.mxu0 0
      %348 = vmatprep.subr.bf16.mxu0 0
      %349 = vmatpush1.bf16.msra.mxu0 0
      %350 = vmatprep.subr.bf16.mxu0 0
      %351 = vmatpush1.bf16.msra.mxu0 0
      %352 = vmatprep.subr.bf16.mxu0 0
      %353 = vmatpush1.bf16.msra.mxu0 0
      %354 = vmatprep.subr.bf16.mxu0 0
      %355 = vmatpush1.bf16.msra.mxu0 0
      %356 = vmatprep.subr.bf16.mxu0 0
      %357 = vmatpush1.bf16.msra.mxu0 0
      %358 = vmatprep.subr.bf16.mxu0 0
      %359 = vmatpush1.bf16.msra.mxu0 0
      %360 = vmatprep.subr.bf16.mxu0 0
      %361 = vmatpush1.bf16.msra.mxu0 0
      %362 = vmatprep.subr.bf16.mxu0 0
      %363 = vmatpush1.bf16.msra.mxu0 0
      %364 = vmatprep.subr.bf16.mxu0 0
      %365 = vmatpush1.bf16.msra.mxu0 0
      %366 = vmatprep.subr.bf16.mxu0 0
      %367 = vmatpush1.bf16.msra.mxu0 0
      %368 = vmatprep.subr.bf16.mxu0 0
      %369 = vmatpush1.bf16.msra.mxu0 0
      %370 = vmatprep.subr.bf16.mxu0 0
      %371 = vmatpush1.bf16.msra.mxu0 0
      %372 = vmatprep.mubr.bf16.mxu0 0
      %373 = vmatmul.mubr.bf16.gmra.mrb[0].mxu0 %v334
      %v374 = vpop.f32.mrb[0].mxu0
      %v375 = vadd.f32 0.0, %v374
      %v376 = vpop.f32.mrb[0].mxu0
      %v377 = vpop.f32.mrb[0].mxu0
      %v378 = vpop.f32.mrb[0].mxu0
      %379 = vdwg.mxu0
      %v380 = vpack.c.bf16 %v375, %v375
      %vm381 = vcmask 60416
      %382 = vst.msk [vmem:[%s263] sm:$0xf] %vm381, %v380
      %p383 = scmp.lt.s32.totalorder %s18, 1
      %s384 = scalar_select %p383, %s18, 1
      %p385 = scmp.lt.s32.totalorder %s19, 3
      %s386 = scalar_select %p385, %s19, 3
      %s387 = smul.addr %s384, 4
      %s388 = sadd.s32 %s386, %s387
      %s389 = smul.addr %s388, 4
      %s390 = scalar_lea.vmem %s3, %s389
      // Predicated region
      $region33: #{_lambda_.10} parent=31 // pred_check
        %p391 = pneg %p130
      $region34: #{_lambda_.10} parent=31 // pred_check_branch
        %393 = sbr.rel (%p391) target = $region36
      $region35: #{_lambda_.10} parent=31 // pred_region
        _
      $region36: #{_lambda_.10} parent=31 // pred_fallthru
        _
    $region32: #{_lambda_.10} parent=5 // pred_fallthru
      _
    %p394 = scmp.le.s32.totalorder 2, %s9
    // Predicated region
    $region37: #{_lambda_.10} parent=5 // pred_check
      %p395 = pneg %p394
    $region38: #{_lambda_.10} parent=5 // pred_check_branch
      %397 = sbr.rel (%p395) target = $region40
    $region39: #{_lambda_.10} parent=5 // pred_region
      %s398 = ssub.s32 %s9, 2
      // Predicated region
      $region41: #{_lambda_.10} parent=39 // pred_check
        %p399 = pneg %p136
      $region42: #{_lambda_.10} parent=39 // pred_check_branch
        %401 = sbr.rel (%p399) target = $region44
      $region43: #{_lambda_.10} parent=39 // pred_region
        %p402 = scmp.lt.s32.totalorder %s20, 1
        %s403 = scalar_select %p402, %s20, 1
        %p404 = scmp.lt.s32.totalorder %s21, 3
        %s405 = scalar_select %p404, %s21, 3
        %s406 = smul.addr %s403, 4
        %s407 = sadd.s32 %s405, %s406
        %s408 = smul.addr %s407, 4
        %s409 = scalar_lea.vmem %s3, %s408
      $region44: #{_lambda_.10} parent=39 // pred_fallthru
        _
    $region40: #{_lambda_.10} parent=5 // pred_fallthru
      _
  $region6: #{_lambda_.10} parent=0 // loop_footer
    %s13 = sadd.s32 1, %s9
  $region7: #{_lambda_.10} parent=0 // loop_footer_branch
    %8 = sbr.rel target = $region3
  $region8: #{_lambda_.10} parent=0 // loop_exit
    _

// kernel: _lambda_.11
$region0: #{_lambda_.11}
  #allocation0 [shape = 'u32[]', space=smem, size = 0x4, offset = 0x4, fixed_abs, tag = 'smem constant byte address 0x4 - core index']
  #allocation1 [shape = 'u32[144,128]{1,0:T(1,128)}', space=vmem, size = 0x12000, scoped, tag = 'internal scratch']
  #allocation2 [shape = 'f32[16,32]{1,0:T(8,128)}', space=vmem, size = 0x2000, scoped, tag = 'scratch operand']
  %s0 = inlined_call_operand.vmem [shape: bf16[16,32], index: 0, kind: input, shape index: {}]
  %s1 = inlined_call_operand.vmem [shape: bf16[32,32], index: 1, kind: input, shape index: {}]
  %s2 = inlined_call_operand.vmem [shape: f32[1,32], index: 2, kind: input, shape index: {}]
  %s3 = inlined_call_operand.vmem [shape: f32[16,32], index: 3, kind: input, shape index: {}]
  %s4 = inlined_call_operand.vmem [shape: f32[16,32], index: 4, kind: output, shape index: {}]
  %s5 = sld [smem:[#allocation0]]
  $region34: #{_lambda_.11} parent=0
    _
  %s7 = ssub.s32 1, %s5
  %s8 = scalar_select 0, %s7, %s5
  // Predicated region
  $region2: #{_lambda_.11} parent=0 // pred_check
    _
  $region3: #{_lambda_.11} parent=0 // pred_check_branch
    %10 = sbr.rel (0) target = $region5
  $region4: #{_lambda_.11} parent=0 // pred_region
    _
  $region5: #{_lambda_.11} parent=0 // pred_fallthru
    _
  // Predicated region
  $region6: #{_lambda_.11} parent=0 // pred_check
    _
  $region7: #{_lambda_.11} parent=0 // pred_check_branch
    %12 = sbr.rel (0) target = $region9
  $region8: #{_lambda_.11} parent=0 // pred_region
    _
  $region9: #{_lambda_.11} parent=0 // pred_fallthru
    _
  // Predicated region
  $region10: #{_lambda_.11} parent=0 // pred_check
    _
  $region11: #{_lambda_.11} parent=0 // pred_check_branch
    %14 = sbr.rel (0) target = $region13
  $region12: #{_lambda_.11} parent=0 // pred_region
    _
  $region13: #{_lambda_.11} parent=0 // pred_fallthru
    _
  // Predicated region
  $region14: #{_lambda_.11} parent=0 // pred_check
    _
  $region15: #{_lambda_.11} parent=0 // pred_check_branch
    %16 = sbr.rel (0) target = $region17
  $region16: #{_lambda_.11} parent=0 // pred_region
    _
  $region17: #{_lambda_.11} parent=0 // pred_fallthru
    _
  %p18 = scmp.eq.s32.totalorder 0, 0
  // Predicated region
  $region18: #{_lambda_.11} parent=0 // pred_check
    %p19 = pneg %p18
  $region19: #{_lambda_.11} parent=0 // pred_check_branch
    %21 = sbr.rel (%p19) target = $region21
  $region20: #{_lambda_.11} parent=0 // pred_region
    %vm22 = vcmask 261120
    %23 = vst.msk [vmem:[#allocation2] sm:$0xff] %vm22, 0.0
    %24 = vst.msk [vmem:[#allocation2 + $0x8] sm:$0xff] %vm22, 0.0
  $region21: #{_lambda_.11} parent=0 // pred_fallthru
    _
  %v25 = vld [vmem:[#allocation2] sm:$0xff]
  %v26 = vld [vmem:[#allocation2 + $0x8] sm:$0xff]
  %v27 = vld [vmem:[%s0] sm:$0xf]
  %v28 = vld [vmem:[%s0 + $0x4] sm:$0xf]
  %v29 = vld [vmem:[%s1] sm:$0xf]
  %v30 = vld [vmem:[%s1 + $0x4] sm:$0xf]
  %v31 = vld [vmem:[%s1 + $0x8] sm:$0xf]
  %v32 = vld [vmem:[%s1 + $0xc] sm:$0xf]
  %v35 = vunpack.c.l.b16 %v27
  %v36 = vunpack.c.l.b16 %v28
  %v37 = vpack.c.b16 %v36, %v35
  %v42 = vunpack.c.l.b16 %v29
  %v43 = vunpack.c.l.b16 %v30
  %v44 = vunpack.c.l.b16 %v31
  %v45 = vunpack.c.l.b16 %v32
  %v46 = vpack.c.b16 %v43, %v42
  %v47 = vpack.c.b16 %v45, %v44
  %vm50 = vcmask 261120
  %v52 = vsel %vm50, %v37, 0
  %54 = vmatprep.subr.bf16.mxu0 0
  %55 = vmatpush1.bf16.msra.mxu0 %v46
  %56 = vmatprep.subr.bf16.mxu0 0
  %57 = vmatpush1.bf16.msra.mxu0 %v47
  %58 = vmatprep.subr.bf16.mxu0 0
  %59 = vmatpush1.bf16.msra.mxu0 0
  %60 = vmatprep.subr.bf16.mxu0 0
  %61 = vmatpush1.bf16.msra.mxu0 0
  %62 = vmatprep.subr.bf16.mxu0 0
  %63 = vmatpush1.bf16.msra.mxu0 0
  %64 = vmatprep.subr.bf16.mxu0 0
  %65 = vmatpush1.bf16.msra.mxu0 0
  %66 = vmatprep.subr.bf16.mxu0 0
  %67 = vmatpush1.bf16.msra.mxu0 0
  %68 = vmatprep.subr.bf16.mxu0 0
  %69 = vmatpush1.bf16.msra.mxu0 0
  %70 = vmatprep.subr.bf16.mxu0 0
  %71 = vmatpush1.bf16.msra.mxu0 0
  %72 = vmatprep.subr.bf16.mxu0 0
  %73 = vmatpush1.bf16.msra.mxu0 0
  %74 = vmatprep.subr.bf16.mxu0 0
  %75 = vmatpush1.bf16.msra.mxu0 0
  %76 = vmatprep.subr.bf16.mxu0 0
  %77 = vmatpush1.bf16.msra.mxu0 0
  %78 = vmatprep.subr.bf16.mxu0 0
  %79 = vmatpush1.bf16.msra.mxu0 0
  %80 = vmatprep.subr.bf16.mxu0 0
  %81 = vmatpush1.bf16.msra.mxu0 0
  %82 = vmatprep.subr.bf16.mxu0 0
  %83 = vmatpush1.bf16.msra.mxu0 0
  %84 = vmatprep.subr.bf16.mxu0 0
  %85 = vmatpush1.bf16.msra.mxu0 0
  %86 = vmatprep.mubr.bf16.mxu0 0
  %87 = vmatmul.mubr.bf16.gmra.mrb[0].mxu0 %v52
  %v88 = vpop.f32.mrb[0].mxu0
  %v89 = vadd.f32 0.0, %v88
  %v90 = vpop.f32.mrb[0].mxu0
  %v91 = vpop.f32.mrb[0].mxu0
  %v92 = vadd.f32 0.0, %v91
  %v93 = vpop.f32.mrb[0].mxu0
  %94 = vdwg.mxu0
  %v95 = vadd.f32 %v25, %v89
  %v96 = vadd.f32 %v26, %v92
  %97 = vst.msk [vmem:[#allocation2] sm:$0xff] %vm50, %v95
  %98 = vst.msk [vmem:[#allocation2 + $0x8] sm:$0xff] %vm50, %v96
  // Predicated region
  $region22: #{_lambda_.11} parent=0 // pred_check
    %p99 = pneg %p18
  $region23: #{_lambda_.11} parent=0 // pred_check_branch
    %101 = sbr.rel (%p99) target = $region25
  $region24: #{_lambda_.11} parent=0 // pred_region
    %v102 = vld [vmem:[#allocation2] sm:$0xff]
    %v103 = vld [vmem:[#allocation2 + $0x8] sm:$0xff]
    %v104 = vld [vmem:[%s2] sm:$0x1]
    %v106 = vlaneseq
    %v107 = vshrl.u32 %v106, 7
    %v108 = vsub.s32 0, %v107
    %v109 = vrot.slane %v104, %v108
    %v111 = vadd.f32 %v102, %v109
    %v112 = vadd.f32 %v103, %v109
    %v113 = vld [vmem:[%s3] sm:$0xff]
    %v114 = vld [vmem:[%s3 + $0x8] sm:$0xff]
    %v115 = vadd.f32 %v111, %v113
    %v116 = vadd.f32 %v112, %v114
    %117 = vst.msk [vmem:[%s4] sm:$0xff] %vm50, %v115
    %118 = vst.msk [vmem:[%s4 + $0x8] sm:$0xff] %vm50, %v116
  $region25: #{_lambda_.11} parent=0 // pred_fallthru
    _
  // Predicated region
  $region26: #{_lambda_.11} parent=0 // pred_check
    _
  $region27: #{_lambda_.11} parent=0 // pred_check_branch
    %120 = sbr.rel (0) target = $region29
  $region28: #{_lambda_.11} parent=0 // pred_region
    _
  $region29: #{_lambda_.11} parent=0 // pred_fallthru
    _
  // Predicated region
  $region30: #{_lambda_.11} parent=0 // pred_check
    _
  $region31: #{_lambda_.11} parent=0 // pred_check_branch
    %122 = sbr.rel (0) target = $region33
  $region32: #{_lambda_.11} parent=0 // pred_region
    _
  $region33: #{_lambda_.11} parent=0 // pred_fallthru
    _

// kernel: _lambda_.13
$region0: #{_lambda_.13}
  #allocation0 [shape = 'u32[]', space=smem, size = 0x4, offset = 0x4, fixed_abs, tag = 'smem constant byte address 0x4 - core index']
  #allocation1 [shape = 'u32[144,128]{1,0:T(1,128)}', space=vmem, size = 0x12000, scoped, tag = 'internal scratch']
  #allocation2 [shape = 'f32[16,32]{1,0:T(8,128)}', space=vmem, size = 0x2000, scoped, tag = 'scratch operand']
  %s0 = inlined_call_operand.vmem [shape: bf16[16,128], index: 0, kind: input, shape index: {}]
  %s1 = inlined_call_operand.vmem [shape: bf16[128,32], index: 1, kind: input, shape index: {}]
  %s2 = inlined_call_operand.vmem [shape: f32[1,32], index: 2, kind: input, shape index: {}]
  %s3 = inlined_call_operand.vmem [shape: f32[16,32], index: 3, kind: input, shape index: {}]
  %s4 = inlined_call_operand.vmem [shape: f32[16,32], index: 4, kind: output, shape index: {}]
  %s5 = sld [smem:[#allocation0]]
  $region34: #{_lambda_.13} parent=0
    _
  %s7 = ssub.s32 1, %s5
  %s8 = scalar_select 0, %s7, %s5
  // Predicated region
  $region2: #{_lambda_.13} parent=0 // pred_check
    _
  $region3: #{_lambda_.13} parent=0 // pred_check_branch
    %10 = sbr.rel (0) target = $region5
  $region4: #{_lambda_.13} parent=0 // pred_region
    _
  $region5: #{_lambda_.13} parent=0 // pred_fallthru
    _
  // Predicated region
  $region6: #{_lambda_.13} parent=0 // pred_check
    _
  $region7: #{_lambda_.13} parent=0 // pred_check_branch
    %12 = sbr.rel (0) target = $region9
  $region8: #{_lambda_.13} parent=0 // pred_region
    _
  $region9: #{_lambda_.13} parent=0 // pred_fallthru
    _
  // Predicated region
  $region10: #{_lambda_.13} parent=0 // pred_check
    _
  $region11: #{_lambda_.13} parent=0 // pred_check_branch
    %14 = sbr.rel (0) target = $region13
  $region12: #{_lambda_.13} parent=0 // pred_region
    _
  $region13: #{_lambda_.13} parent=0 // pred_fallthru
    _
  // Predicated region
  $region14: #{_lambda_.13} parent=0 // pred_check
    _
  $region15: #{_lambda_.13} parent=0 // pred_check_branch
    %16 = sbr.rel (0) target = $region17
  $region16: #{_lambda_.13} parent=0 // pred_region
    _
  $region17: #{_lambda_.13} parent=0 // pred_fallthru
    _
  %p18 = scmp.eq.s32.totalorder 0, 0
  // Predicated region
  $region18: #{_lambda_.13} parent=0 // pred_check
    %p19 = pneg %p18
  $region19: #{_lambda_.13} parent=0 // pred_check_branch
    %21 = sbr.rel (%p19) target = $region21
  $region20: #{_lambda_.13} parent=0 // pred_region
    %vm22 = vcmask 261120
    %23 = vst.msk [vmem:[#allocation2] sm:$0xff] %vm22, 0.0
    %24 = vst.msk [vmem:[#allocation2 + $0x8] sm:$0xff] %vm22, 0.0
  $region21: #{_lambda_.13} parent=0 // pred_fallthru
    _
  %v25 = vld [vmem:[#allocation2] sm:$0xff]
  %v26 = vld [vmem:[#allocation2 + $0x8] sm:$0xff]
  %v27 = vld [vmem:[%s0] sm:$0xf]
  %v28 = vld [vmem:[%s0 + $0x4] sm:$0xf]
  %v29 = vld [vmem:[%s1] sm:$0xf]
  %v30 = vld [vmem:[%s1 + $0x4] sm:$0xf]
  %v31 = vld [vmem:[%s1 + $0x8] sm:$0xf]
  %v32 = vld [vmem:[%s1 + $0xc] sm:$0xf]
  %v33 = vld [vmem:[%s1 + $0x10] sm:$0xf]
  %v34 = vld [vmem:[%s1 + $0x14] sm:$0xf]
  %v35 = vld [vmem:[%s1 + $0x18] sm:$0xf]
  %v36 = vld [vmem:[%s1 + $0x1c] sm:$0xf]
  %v37 = vld [vmem:[%s1 + $0x20] sm:$0xf]
  %v38 = vld [vmem:[%s1 + $0x24] sm:$0xf]
  %v39 = vld [vmem:[%s1 + $0x28] sm:$0xf]
  %v40 = vld [vmem:[%s1 + $0x2c] sm:$0xf]
  %v41 = vld [vmem:[%s1 + $0x30] sm:$0xf]
  %v42 = vld [vmem:[%s1 + $0x34] sm:$0xf]
  %v43 = vld [vmem:[%s1 + $0x38] sm:$0xf]
  %v44 = vld [vmem:[%s1 + $0x3c] sm:$0xf]
  %v47 = vunpack.c.l.b16 %v27
  %v48 = vunpack.c.l.b16 %v28
  %v49 = vpack.c.b16 %v48, %v47
  %v67 = vunpack.c.l.b16 %v29
  %v68 = vunpack.c.l.b16 %v30
  %v69 = vunpack.c.l.b16 %v31
  %v70 = vunpack.c.l.b16 %v32
  %v71 = vunpack.c.l.b16 %v33
  %v72 = vunpack.c.l.b16 %v34
  %v73 = vunpack.c.l.b16 %v35
  %v74 = vunpack.c.l.b16 %v36
  %v75 = vunpack.c.l.b16 %v37
  %v76 = vunpack.c.l.b16 %v38
  %v77 = vunpack.c.l.b16 %v39
  %v78 = vunpack.c.l.b16 %v40
  %v79 = vunpack.c.l.b16 %v41
  %v80 = vunpack.c.l.b16 %v42
  %v81 = vunpack.c.l.b16 %v43
  %v82 = vunpack.c.l.b16 %v44
  %v83 = vpack.c.b16 %v68, %v67
  %v84 = vpack.c.b16 %v70, %v69
  %v85 = vpack.c.b16 %v72, %v71
  %v86 = vpack.c.b16 %v74, %v73
  %v87 = vpack.c.b16 %v76, %v75
  %v88 = vpack.c.b16 %v78, %v77
  %v89 = vpack.c.b16 %v80, %v79
  %v90 = vpack.c.b16 %v82, %v81
  %99 = vmatprep.subr.bf16.mxu0 0
  %100 = vmatpush1.bf16.msra.mxu0 %v83
  %101 = vmatprep.subr.bf16.mxu0 0
  %102 = vmatpush1.bf16.msra.mxu0 %v84
  %103 = vmatprep.subr.bf16.mxu0 0
  %104 = vmatpush1.bf16.msra.mxu0 %v85
  %105 = vmatprep.subr.bf16.mxu0 0
  %106 = vmatpush1.bf16.msra.mxu0 %v86
  %107 = vmatprep.subr.bf16.mxu0 0
  %108 = vmatpush1.bf16.msra.mxu0 %v87
  %109 = vmatprep.subr.bf16.mxu0 0
  %110 = vmatpush1.bf16.msra.mxu0 %v88
  %111 = vmatprep.subr.bf16.mxu0 0
  %112 = vmatpush1.bf16.msra.mxu0 %v89
  %113 = vmatprep.subr.bf16.mxu0 0
  %114 = vmatpush1.bf16.msra.mxu0 %v90
  %115 = vmatprep.subr.bf16.mxu0 0
  %116 = vmatpush1.bf16.msra.mxu0 0
  %117 = vmatprep.subr.bf16.mxu0 0
  %118 = vmatpush1.bf16.msra.mxu0 0
  %119 = vmatprep.subr.bf16.mxu0 0
  %120 = vmatpush1.bf16.msra.mxu0 0
  %121 = vmatprep.subr.bf16.mxu0 0
  %122 = vmatpush1.bf16.msra.mxu0 0
  %123 = vmatprep.subr.bf16.mxu0 0
  %124 = vmatpush1.bf16.msra.mxu0 0
  %125 = vmatprep.subr.bf16.mxu0 0
  %126 = vmatpush1.bf16.msra.mxu0 0
  %127 = vmatprep.subr.bf16.mxu0 0
  %128 = vmatpush1.bf16.msra.mxu0 0
  %129 = vmatprep.subr.bf16.mxu0 0
  %130 = vmatpush1.bf16.msra.mxu0 0
  %131 = vmatprep.mubr.bf16.mxu0 0
  %132 = vmatmul.mubr.bf16.gmra.mrb[0].mxu0 %v49
  %v133 = vpop.f32.mrb[0].mxu0
  %v134 = vadd.f32 0.0, %v133
  %v135 = vpop.f32.mrb[0].mxu0
  %v136 = vpop.f32.mrb[0].mxu0
  %v137 = vadd.f32 0.0, %v136
  %v138 = vpop.f32.mrb[0].mxu0
  %139 = vdwg.mxu0
  %v140 = vadd.f32 %v25, %v134
  %v141 = vadd.f32 %v26, %v137
  %vm142 = vcmask 261120
  %143 = vst.msk [vmem:[#allocation2] sm:$0xff] %vm142, %v140
  %144 = vst.msk [vmem:[#allocation2 + $0x8] sm:$0xff] %vm142, %v141
  // Predicated region
  $region22: #{_lambda_.13} parent=0 // pred_check
    %p145 = pneg %p18
  $region23: #{_lambda_.13} parent=0 // pred_check_branch
    %147 = sbr.rel (%p145) target = $region25
  $region24: #{_lambda_.13} parent=0 // pred_region
    %v148 = vld [vmem:[#allocation2] sm:$0xff]
    %v149 = vld [vmem:[#allocation2 + $0x8] sm:$0xff]
    %v150 = vld [vmem:[%s2] sm:$0x1]
    %v152 = vlaneseq
    %v153 = vshrl.u32 %v152, 7
    %v154 = vsub.s32 0, %v153
    %v155 = vrot.slane %v150, %v154
    %v157 = vadd.f32 %v148, %v155
    %v158 = vadd.f32 %v149, %v155
    %v159 = vld [vmem:[%s3] sm:$0xff]
    %v160 = vld [vmem:[%s3 + $0x8] sm:$0xff]
    %v161 = vadd.f32 %v157, %v159
    %v162 = vadd.f32 %v158, %v160
    %163 = vst.msk [vmem:[%s4] sm:$0xff] %vm142, %v161
    %164 = vst.msk [vmem:[%s4 + $0x8] sm:$0xff] %vm142, %v162
  $region25: #{_lambda_.13} parent=0 // pred_fallthru
    _
  // Predicated region
  $region26: #{_lambda_.13} parent=0 // pred_check
    _
  $region27: #{_lambda_.13} parent=0 // pred_check_branch
    %166 = sbr.rel (0) target = $region29
  $region28: #{_lambda_.13} parent=0 // pred_region
    _
  $region29: #{_lambda_.13} parent=0 // pred_fallthru
    _
  // Predicated region
  $region30: #{_lambda_.13} parent=0 // pred_check
    _
  $region31: #{_lambda_.13} parent=0 // pred_check_branch
    %168 = sbr.rel (0) target = $region33
  $region32: #{_lambda_.13} parent=0 // pred_region
    _
  $region33: #{_lambda_.13} parent=0 // pred_fallthru
    _

// kernel: _lambda_.15
$region0: #{_lambda_.15}
  #allocation0 [shape = 'u32[]', space=smem, size = 0x4, offset = 0x4, fixed_abs, tag = 'smem constant byte address 0x4 - core index']
  #allocation1 [shape = 'u32[144,128]{1,0:T(1,128)}', space=vmem, size = 0x12000, scoped, tag = 'internal scratch']
  %s0 = inlined_call_operand.vmem [shape: bf16[2,4,8,8], index: 0, kind: input, shape index: {}]
  %s1 = inlined_call_operand.vmem [shape: bf16[2,4,8,8], index: 1, kind: input, shape index: {}]
  %s2 = inlined_call_operand.vmem [shape: f32[2,4,8,8], index: 2, kind: output, shape index: {}]
  %s3 = sld [smem:[#allocation0]]
  $region41: #{_lambda_.15} parent=0
    _
  %s5 = ssub.s32 1, %s3
  %s6 = scalar_select 0, %s5, %s3
  loop: start=0, step=1, limit=10
  $region2: #{_lambda_.15} parent=0 // loop_pre_header
    _
  $region3: #{_lambda_.15} parent=0 // loop_header
    %s8 = sphi 0, %s12
    %p9 = scmp.ge.s32.totalorder %s8, 10
    %s15 = sphi 0, %s27
    %s16 = sphi 0, %s23
    %s17 = sphi 0, %s15
    %s18 = sphi 0, %s16
    %s19 = sphi 0, %s17
    %s20 = sphi 0, %s18
    %s32 = sphi 0, %s34
    %s35 = sphi 0, %s32
    %s36 = sphi 0, %s35
    %s52 = sphi 0, %s36
    %s60 = sphi 0, %s62
    %s63 = sphi 0, %s60
    %s64 = sphi 0, %s63
    %s80 = sphi 0, %s64
    %s88 = sphi 0, %s90
    %s91 = sphi 0, %s88
    %s92 = sphi 0, %s91
    %s108 = sphi 0, %s92
  $region4: #{_lambda_.15} parent=0 // loop_header_branch
    %11 = sbr.rel (%p9) target = $region8
  $region5: #{_lambda_.15} parent=0 // loop_body
    %s13 = ssub.s32 %s8, 1
    %s14 = ssub.s32 %s8, 2
    %s21 = sadd.s32 1, %s16
    %p22 = scmp.ge.s32.totalorder %s21, 4
    %s23 = scalar_select %p22, 0, %s21
    %s24 = sadd.s32 1, %s15
    %s25 = scalar_select %p22, %s24, %s15
    %p26 = scmp.ge.s32.totalorder %s25, 2
    %s27 = scalar_select %p26, 0, %s25
    %s28 = ssub.s32 %s15, %s27
    %s29 = ssub.s32 %s16, %s23
    %s30 = sor.u32 %s28, %s29
    %p31 = scmp.eq.s32.totalorder %s30, 0
    %s33 = sadd.s32 %s32, 1
    %s34 = scalar_select %p31, %s32, %s33
    %p37 = pneg %p31
    %p38 = scmp.eq.s32.totalorder %s8, 7
    %p39 = por %p37, %p38
    %p40 = scmp.ne.s32.totalorder %s32, %s35
    %p41 = scmp.eq.s32.totalorder %s8, 0
    %p42 = por %p40, %p41
    %p43 = scmp.ne.s32.totalorder %s32, %s35
    %p44 = scmp.eq.s32.totalorder %s13, 7
    %p45 = por %p43, %p44
    %p46 = scmp.ne.s32.totalorder %s35, %s36
    %p47 = scmp.eq.s32.totalorder %s13, 0
    %p48 = por %p46, %p47
    %p49 = scmp.ne.s32.totalorder %s35, %s36
    %p50 = scmp.eq.s32.totalorder %s14, 7
    %p51 = por %p49, %p50
    %p53 = scmp.ne.s32.totalorder %s36, %s52
    %p54 = scmp.eq.s32.totalorder %s14, 0
    %p55 = por %p53, %p54
    %s56 = ssub.s32 %s15, %s27
    %s57 = ssub.s32 %s16, %s23
    %s58 = sor.u32 %s56, %s57
    %p59 = scmp.eq.s32.totalorder %s58, 0
    %s61 = sadd.s32 %s60, 1
    %s62 = scalar_select %p59, %s60, %s61
    %p65 = pneg %p59
    %p66 = scmp.eq.s32.totalorder %s8, 7
    %p67 = por %p65, %p66
    %p68 = scmp.ne.s32.totalorder %s60, %s63
    %p69 = scmp.eq.s32.totalorder %s8, 0
    %p70 = por %p68, %p69
    %p71 = scmp.ne.s32.totalorder %s60, %s63
    %p72 = scmp.eq.s32.totalorder %s13, 7
    %p73 = por %p71, %p72
    %p74 = scmp.ne.s32.totalorder %s63, %s64
    %p75 = scmp.eq.s32.totalorder %s13, 0
    %p76 = por %p74, %p75
    %p77 = scmp.ne.s32.totalorder %s63, %s64
    %p78 = scmp.eq.s32.totalorder %s14, 7
    %p79 = por %p77, %p78
    %p81 = scmp.ne.s32.totalorder %s64, %s80
    %p82 = scmp.eq.s32.totalorder %s14, 0
    %p83 = por %p81, %p82
    %s84 = ssub.s32 %s15, %s27
    %s85 = ssub.s32 %s16, %s23
    %s86 = sor.u32 %s84, %s85
    %p87 = scmp.eq.s32.totalorder %s86, 0
    %s89 = sadd.s32 %s88, 1
    %s90 = scalar_select %p87, %s88, %s89
    %p93 = pneg %p87
    %p94 = scmp.eq.s32.totalorder %s8, 7
    %p95 = por %p93, %p94
    %p96 = scmp.ne.s32.totalorder %s88, %s91
    %p97 = scmp.eq.s32.totalorder %s8, 0
    %p98 = por %p96, %p97
    %p99 = scmp.ne.s32.totalorder %s88, %s91
    %p100 = scmp.eq.s32.totalorder %s13, 7
    %p101 = por %p99, %p100
    %p102 = scmp.ne.s32.totalorder %s91, %s92
    %p103 = scmp.eq.s32.totalorder %s13, 0
    %p104 = por %p102, %p103
    %p105 = scmp.ne.s32.totalorder %s91, %s92
    %p106 = scmp.eq.s32.totalorder %s14, 7
    %p107 = por %p105, %p106
    %p109 = scmp.ne.s32.totalorder %s92, %s108
    %p110 = scmp.eq.s32.totalorder %s14, 0
    %p111 = por %p109, %p110
    %p112 = scmp.le.s32.totalorder 1, %s8
    %p113 = scmp.lt.s32.totalorder %s8, 9
    %p114 = pnand %p112, %p113
    %p115 = pneg %p114
    // Predicated region
    $region9: #{_lambda_.15} parent=5 // pred_check
      _
    $region10: #{_lambda_.15} parent=5 // pred_check_branch
      %117 = sbr.rel (%p114) target = $region12
    $region11: #{_lambda_.15} parent=5 // pred_region
      %s118 = ssub.s32 %s8, 1
    $region12: #{_lambda_.15} parent=5 // pred_fallthru
      _
    %p119 = scmp.lt.s32.totalorder %s8, 8
    // Predicated region
    $region13: #{_lambda_.15} parent=5 // pred_check
      %p120 = pneg %p119
    $region14: #{_lambda_.15} parent=5 // pred_check_branch
      %122 = sbr.rel (%p120) target = $region16
    $region15: #{_lambda_.15} parent=5 // pred_region
      // Predicated region
      $region17: #{_lambda_.15} parent=15 // pred_check
        %p123 = pneg %p42
      $region18: #{_lambda_.15} parent=15 // pred_check_branch
        %125 = sbr.rel (%p123) target = $region20
      $region19: #{_lambda_.15} parent=15 // pred_region
        %p126 = scmp.lt.s32.totalorder %s15, 1
        %s127 = scalar_select %p126, %s15, 1
        %p128 = scmp.lt.s32.totalorder %s16, 3
        %s129 = scalar_select %p128, %s16, 3
        %s130 = smul.addr %s127, 4
        %s131 = sadd.s32 %s129, %s130
        %s132 = smul.addr %s131, 4
        %s133 = scalar_lea.vmem %s0, %s132
      $region20: #{_lambda_.15} parent=15 // pred_fallthru
        _
      // Predicated region
      $region21: #{_lambda_.15} parent=15 // pred_check
        %p134 = pneg %p70
      $region22: #{_lambda_.15} parent=15 // pred_check_branch
        %136 = sbr.rel (%p134) target = $region24
      $region23: #{_lambda_.15} parent=15 // pred_region
        %p137 = scmp.lt.s32.totalorder %s15, 1
        %s138 = scalar_select %p137, %s15, 1
        %p139 = scmp.lt.s32.totalorder %s16, 3
        %s140 = scalar_select %p139, %s16, 3
        %s141 = smul.addr %s138, 4
        %s142 = sadd.s32 %s140, %s141
        %s143 = smul.addr %s142, 4
        %s144 = scalar_lea.vmem %s1, %s143
      $region24: #{_lambda_.15} parent=15 // pred_fallthru
        _
    $region16: #{_lambda_.15} parent=5 // pred_fallthru
      _
    %p145 = scmp.le.s32.totalorder 1, %s8
    %p146 = scmp.lt.s32.totalorder %s8, 9
    %p147 = pnand %p145, %p146
    %p148 = pneg %p147
    // Predicated region
    $region25: #{_lambda_.15} parent=5 // pred_check
      _
    $region26: #{_lambda_.15} parent=5 // pred_check_branch
      %150 = sbr.rel (%p147) target = $region28
    $region27: #{_lambda_.15} parent=5 // pred_region
      %s151 = ssub.s32 %s8, 1
      %p152 = scmp.lt.s32.totalorder %s17, 1
      %s153 = scalar_select %p152, %s17, 1
      %p154 = scmp.lt.s32.totalorder %s18, 3
      %s155 = scalar_select %p154, %s18, 3
      %s156 = smul.addr %s153, 4
      %s157 = sadd.s32 %s155, %s156
      %s158 = smul.addr %s157, 4
      %s159 = scalar_lea.vmem %s0, %s158
      %p160 = pneg %p48
      %p161 = pneg %p45
      %p162 = scmp.lt.s32.totalorder %s17, 1
      %s163 = scalar_select %p162, %s17, 1
      %p164 = scmp.lt.s32.totalorder %s18, 3
      %s165 = scalar_select %p164, %s18, 3
      %s166 = smul.addr %s163, 4
      %s167 = sadd.s32 %s165, %s166
      %s168 = smul.addr %s167, 4
      %s169 = scalar_lea.vmem %s1, %s168
      %p170 = pneg %p76
      %p171 = pneg %p73
      %p172 = pneg %p104
      %p173 = pneg %p101
      %p174 = scmp.lt.s32.totalorder %s17, 1
      %s175 = scalar_select %p174, %s17, 1
      %p176 = scmp.lt.s32.totalorder %s18, 3
      %s177 = scalar_select %p176, %s18, 3
      %s178 = smul.addr %s175, 4
      %s179 = sadd.s32 %s177, %s178
      %s180 = smul.addr %s179, 8
      %s181 = scalar_lea.vmem %s2, %s180
      %p182 = scmp.lt.s32.totalorder %s17, 1
      %s183 = scalar_select %p182, %s17, 1
      %p184 = scmp.lt.s32.totalorder %s18, 3
      %s185 = scalar_select %p184, %s18, 3
      %s186 = smul.addr %s183, 4
      %s187 = sadd.s32 %s185, %s186
      %s188 = smul.addr %s187, 4
      %s189 = scalar_lea.vmem %s0, %s188
      %p190 = scmp.lt.s32.totalorder %s17, 1
      %s191 = scalar_select %p190, %s17, 1
      %p192 = scmp.lt.s32.totalorder %s18, 3
      %s193 = scalar_select %p192, %s18, 3
      %s194 = smul.addr %s191, 4
      %s195 = sadd.s32 %s193, %s194
      %s196 = smul.addr %s195, 4
      %s197 = scalar_lea.vmem %s1, %s196
      %p198 = scmp.lt.s32.totalorder %s17, 1
      %s199 = scalar_select %p198, %s17, 1
      %p200 = scmp.lt.s32.totalorder %s18, 3
      %s201 = scalar_select %p200, %s18, 3
      %s202 = smul.addr %s199, 4
      %s203 = sadd.s32 %s201, %s202
      %s204 = smul.addr %s203, 8
      %s205 = scalar_lea.vmem %s2, %s204
      %v207 = vld [vmem:[%s189] sm:$0xf]
      %v208 = vld [vmem:[%s197] sm:$0xf]
      %vm209 = vcmask 64512
      %v211 = vsel %vm209, %v207, 0
      %v214 = vsel %vm209, %v208, 0
      %216 = vmatprep.subr.bf16.mxu0 0
      %217 = vmatpush1.bf16.xpose.msra.mxu0 %v214
      %218 = vmatprep.subr.bf16.mxu0 0
      %219 = vmatpush1.bf16.xpose.msra.mxu0 0
      %220 = vmatprep.subr.bf16.mxu0 0
      %221 = vmatpush1.bf16.xpose.msra.mxu0 0
      %222 = vmatprep.subr.bf16.mxu0 0
      %223 = vmatpush1.bf16.xpose.msra.mxu0 0
      %224 = vmatprep.subr.bf16.mxu0 0
      %225 = vmatpush1.bf16.xpose.msra.mxu0 0
      %226 = vmatprep.subr.bf16.mxu0 0
      %227 = vmatpush1.bf16.xpose.msra.mxu0 0
      %228 = vmatprep.subr.bf16.mxu0 0
      %229 = vmatpush1.bf16.xpose.msra.mxu0 0
      %230 = vmatprep.subr.bf16.mxu0 0
      %231 = vmatpush1.bf16.xpose.msra.mxu0 0
      %232 = vmatprep.subr.bf16.mxu0 0
      %233 = vmatpush1.bf16.xpose.msra.mxu0 0
      %234 = vmatprep.subr.bf16.mxu0 0
      %235 = vmatpush1.bf16.xpose.msra.mxu0 0
      %236 = vmatprep.subr.bf16.mxu0 0
      %237 = vmatpush1.bf16.xpose.msra.mxu0 0
      %238 = vmatprep.subr.bf16.mxu0 0
      %239 = vmatpush1.bf16.xpose.msra.mxu0 0
      %240 = vmatprep.subr.bf16.mxu0 0
      %241 = vmatpush1.bf16.xpose.msra.mxu0 0
      %242 = vmatprep.subr.bf16.mxu0 0
      %243 = vmatpush1.bf16.xpose.msra.mxu0 0
      %244 = vmatprep.subr.bf16.mxu0 0
      %245 = vmatpush1.bf16.xpose.msra.mxu0 0
      %246 = vmatprep.subr.bf16.mxu0 0
      %247 = vmatpush1.bf16.xpose.msra.mxu0 0
      %248 = vmatprep.mubr.bf16.mxu0 0
      %249 = vmatmul.mubr.bf16.gmra.mrb[0].mxu0 %v211
      %v250 = vpop.f32.mrb[0].mxu0
      %v251 = vadd.f32 0.0, %v250
      %v252 = vpop.f32.mrb[0].mxu0
      %v253 = vpop.f32.mrb[0].mxu0
      %v254 = vpop.f32.mrb[0].mxu0
      %255 = vdwg.mxu0
      %v256 = vmul.f32 %v251, 0.35355338
      %v257 = vlaneseq
      %v258 = vand.u32 %v257, 127
      %vm259 = vcmp.lt.s32.totalorder %v258, 5
      %v260 = vsel %vm259, %v256, -1e+30
      %v261 = vsel %vm209, %v260, -inf
      %262 = vmax.xlane.f32.xlu0 %v261
      %v263 = vpop.xlane.xlu0 %262
      %v264 = vsub.f32 %v260, %v263
      %v265 = vmul.f32 %v264, 1.442695
      %v266 = vpow.pop %v265
      %v267 = vsel %vm209, %v266, 0.0
      %268 = vadd.xlane.f32.xlu0 %v267
      %v269 = vpop.xlane.xlu0 %268
      %v270 = vrcp.pop %v269
      %v271 = vmul.f32 1.0, %v270
      %v272 = vmul.f32 %v266, %v271
      %273 = vst.msk [vmem:[%s205] sm:$0xff] %vm209, %v272
      %p274 = scmp.lt.s32.totalorder %s17, 1
      %s275 = scalar_select %p274, %s17, 1
      %p276 = scmp.lt.s32.totalorder %s18, 3
      %s277 = scalar_select %p276, %s18, 3
      %s278 = smul.addr %s275, 4
      %s279 = sadd.s32 %s277, %s278
      %s280 = smul.addr %s279, 8
      %s281 = scalar_lea.vmem %s2, %s280
      // Predicated region
      $region29: #{_lambda_.15} parent=27 // pred_check
        %p282 = pneg %p101
      $region30: #{_lambda_.15} parent=27 // pred_check_branch
        %284 = sbr.rel (%p282) target = $region32
      $region31: #{_lambda_.15} parent=27 // pred_region
        _
      $region32: #{_lambda_.15} parent=27 // pred_fallthru
        _
    $region28: #{_lambda_.15} parent=5 // pred_fallthru
      _
    %p285 = scmp.le.s32.totalorder 2, %s8
    // Predicated region
    $region33: #{_lambda_.15} parent=5 // pred_check
      %p286 = pneg %p285
    $region34: #{_lambda_.15} parent=5 // pred_check_branch
      %288 = sbr.rel (%p286) target = $region36
    $region35: #{_lambda_.15} parent=5 // pred_region
      %s289 = ssub.s32 %s8, 2
      // Predicated region
      $region37: #{_lambda_.15} parent=35 // pred_check
        %p290 = pneg %p107
      $region38: #{_lambda_.15} parent=35 // pred_check_branch
        %292 = sbr.rel (%p290) target = $region40
      $region39: #{_lambda_.15} parent=35 // pred_region
        %p293 = scmp.lt.s32.totalorder %s19, 1
        %s294 = scalar_select %p293, %s19, 1
        %p295 = scmp.lt.s32.totalorder %s20, 3
        %s296 = scalar_select %p295, %s20, 3
        %s297 = smul.addr %s294, 4
        %s298 = sadd.s32 %s296, %s297
        %s299 = smul.addr %s298, 8
        %s300 = scalar_lea.vmem %s2, %s299
      $region40: #{_lambda_.15} parent=35 // pred_fallthru
        _
    $region36: #{_lambda_.15} parent=5 // pred_fallthru
      _
  $region6: #{_lambda_.15} parent=0 // loop_footer
    %s12 = sadd.s32 1, %s8
  $region7: #{_lambda_.15} parent=0 // loop_footer_branch
    %7 = sbr.rel target = $region3
  $region8: #{_lambda_.15} parent=0 // loop_exit
    _

// kernel: _lambda_.12
$region0: #{_lambda_.12}
  #allocation0 [shape = 'u32[]', space=smem, size = 0x4, offset = 0x4, fixed_abs, tag = 'smem constant byte address 0x4 - core index']
  #allocation1 [shape = 'u32[144,128]{1,0:T(1,128)}', space=vmem, size = 0x12000, scoped, tag = 'internal scratch']
  #allocation2 [shape = 'bf16[16,32]{1,0:T(16,128)(2,1)}', space=vmem, size = 0x1000, scoped, tag = 'scratch operand']
  %s0 = inlined_call_operand.vmem [shape: f32[16,32], index: 0, kind: input, shape index: {}]
  %s1 = inlined_call_operand.vmem [shape: f32[1,32], index: 1, kind: input, shape index: {}]
  %s2 = inlined_call_operand.vmem [shape: f32[1,32], index: 2, kind: input, shape index: {}]
  %s3 = inlined_call_operand.vmem [shape: bf16[32,128], index: 3, kind: input, shape index: {}]
  %s4 = inlined_call_operand.vmem [shape: f32[1,128], index: 4, kind: input, shape index: {}]
  %s5 = inlined_call_operand.vmem [shape: bf16[16,128], index: 5, kind: output, shape index: {}]
  %s6 = sld [smem:[#allocation0]]
  $region34: #{_lambda_.12} parent=0
    _
  %s8 = ssub.s32 1, %s6
  %s9 = scalar_select 0, %s8, %s6
  // Predicated region
  $region2: #{_lambda_.12} parent=0 // pred_check
    _
  $region3: #{_lambda_.12} parent=0 // pred_check_branch
    %11 = sbr.rel (0) target = $region5
  $region4: #{_lambda_.12} parent=0 // pred_region
    _
  $region5: #{_lambda_.12} parent=0 // pred_fallthru
    _
  // Predicated region
  $region6: #{_lambda_.12} parent=0 // pred_check
    _
  $region7: #{_lambda_.12} parent=0 // pred_check_branch
    %13 = sbr.rel (0) target = $region9
  $region8: #{_lambda_.12} parent=0 // pred_region
    _
  $region9: #{_lambda_.12} parent=0 // pred_fallthru
    _
  // Predicated region
  $region10: #{_lambda_.12} parent=0 // pred_check
    _
  $region11: #{_lambda_.12} parent=0 // pred_check_branch
    %15 = sbr.rel (0) target = $region13
  $region12: #{_lambda_.12} parent=0 // pred_region
    _
  $region13: #{_lambda_.12} parent=0 // pred_fallthru
    _
  // Predicated region
  $region14: #{_lambda_.12} parent=0 // pred_check
    _
  $region15: #{_lambda_.12} parent=0 // pred_check_branch
    %17 = sbr.rel (0) target = $region17
  $region16: #{_lambda_.12} parent=0 // pred_region
    _
  $region17: #{_lambda_.12} parent=0 // pred_fallthru
    _
  // Predicated region
  $region18: #{_lambda_.12} parent=0 // pred_check
    _
  $region19: #{_lambda_.12} parent=0 // pred_check_branch
    %19 = sbr.rel (0) target = $region21
  $region20: #{_lambda_.12} parent=0 // pred_region
    _
  $region21: #{_lambda_.12} parent=0 // pred_fallthru
    _
  %p21 = scmp.eq.s32.totalorder 0, 0
  // Predicated region
  $region22: #{_lambda_.12} parent=0 // pred_check
    %p22 = pneg %p21
  $region23: #{_lambda_.12} parent=0 // pred_check_branch
    %24 = sbr.rel (%p22) target = $region25
  $region24: #{_lambda_.12} parent=0 // pred_region
    %v25 = vld [vmem:[%s0] sm:$0xff]
    %v26 = vld [vmem:[%s0 + $0x8] sm:$0xff]
    %vm27 = vcmask 261120
    %v28 = vsel %vm27, %v25, 0.0
    %29 = vadd.xlane.f32.xlu0 %v28
    %v30 = vpop.xlane.xlu0 %29
    %v31 = vsel %vm27, %v26, 0.0
    %32 = vadd.xlane.f32.xlu0 %v31
    %v33 = vpop.xlane.xlu0 %32
    %v34 = vrcp.pop 32.0
    %v35 = vmul.f32 %v30, %v34
    %v36 = vmul.f32 %v33, %v34
    %v37 = vsub.f32 %v25, %v35
    %v38 = vsub.f32 %v26, %v36
    %v39 = vmul.f32 %v37, %v37
    %v40 = vmul.f32 %v38, %v38
    %v41 = vsel %vm27, %v39, 0.0
    %42 = vadd.xlane.f32.xlu0 %v41
    %v43 = vpop.xlane.xlu0 %42
    %v44 = vsel %vm27, %v40, 0.0
    %45 = vadd.xlane.f32.xlu0 %v44
    %v46 = vpop.xlane.xlu0 %45
    %v47 = vmul.f32 %v43, %v34
    %v48 = vmul.f32 %v46, %v34
    %v49 = vadd.f32 %v47, 1e-05
    %v50 = vadd.f32 %v48, 1e-05
    %v51 = vrsqrt.pop %v49
    %v52 = vrsqrt.pop %v50
    %v53 = vmul.f32 %v37, %v51
    %v54 = vmul.f32 %v38, %v52
    %v55 = vld [vmem:[%s1] sm:$0x1]
    %v57 = vlaneseq
    %v58 = vshrl.u32 %v57, 7
    %v59 = vsub.s32 0, %v58
    %v60 = vrot.slane %v55, %v59
    %v62 = vmul.f32 %v53, %v60
    %v63 = vmul.f32 %v54, %v60
    %v64 = vld [vmem:[%s2] sm:$0x1]
    %v66 = vlaneseq
    %v67 = vshrl.u32 %v66, 7
    %v68 = vsub.s32 0, %v67
    %v69 = vrot.slane %v64, %v68
    %v71 = vadd.f32 %v62, %v69
    %v72 = vadd.f32 %v63, %v69
    %v73 = vpack.c.bf16 %v72, %v71
    %74 = vst.msk [vmem:[#allocation2] sm:$0xff] %vm27, %v73
  $region25: #{_lambda_.12} parent=0 // pred_fallthru
    _
  %v75 = vld [vmem:[#allocation2] sm:$0xff]
  %v76 = vld [vmem:[%s3] sm:$0xf]
  %v77 = vld [vmem:[%s3 + $0x4] sm:$0xf]
  %v78 = vld [vmem:[%s3 + $0x8] sm:$0xf]
  %v79 = vld [vmem:[%s3 + $0xc] sm:$0xf]
  %v80 = vld [vmem:[%s4] sm:$0x1]
  %v82 = vlaneseq
  %v83 = vshrl.u32 %v82, 7
  %v84 = vsub.s32 0, %v83
  %v85 = vrot.slane %v80, %v84
  %v91 = vunpack.c.l.b16 %v76
  %v92 = vunpack.c.l.b16 %v77
  %v93 = vunpack.c.l.b16 %v78
  %v94 = vunpack.c.l.b16 %v79
  %v95 = vpack.c.b16 %v92, %v91
  %v96 = vpack.c.b16 %v94, %v93
  %vm99 = vcmask 261120
  %v101 = vsel %vm99, %v75, 0
  %103 = vmatprep.subr.bf16.mxu0 0
  %104 = vmatpush1.bf16.msra.mxu0 %v95
  %105 = vmatprep.subr.bf16.mxu0 0
  %106 = vmatpush1.bf16.msra.mxu0 %v96
  %107 = vmatprep.subr.bf16.mxu0 0
  %108 = vmatpush1.bf16.msra.mxu0 0
  %109 = vmatprep.subr.bf16.mxu0 0
  %110 = vmatpush1.bf16.msra.mxu0 0
  %111 = vmatprep.subr.bf16.mxu0 0
  %112 = vmatpush1.bf16.msra.mxu0 0
  %113 = vmatprep.subr.bf16.mxu0 0
  %114 = vmatpush1.bf16.msra.mxu0 0
  %115 = vmatprep.subr.bf16.mxu0 0
  %116 = vmatpush1.bf16.msra.mxu0 0
  %117 = vmatprep.subr.bf16.mxu0 0
  %118 = vmatpush1.bf16.msra.mxu0 0
  %119 = vmatprep.subr.bf16.mxu0 0
  %120 = vmatpush1.bf16.msra.mxu0 0
  %121 = vmatprep.subr.bf16.mxu0 0
  %122 = vmatpush1.bf16.msra.mxu0 0
  %123 = vmatprep.subr.bf16.mxu0 0
  %124 = vmatpush1.bf16.msra.mxu0 0
  %125 = vmatprep.subr.bf16.mxu0 0
  %126 = vmatpush1.bf16.msra.mxu0 0
  %127 = vmatprep.subr.bf16.mxu0 0
  %128 = vmatpush1.bf16.msra.mxu0 0
  %129 = vmatprep.subr.bf16.mxu0 0
  %130 = vmatpush1.bf16.msra.mxu0 0
  %131 = vmatprep.subr.bf16.mxu0 0
  %132 = vmatpush1.bf16.msra.mxu0 0
  %133 = vmatprep.subr.bf16.mxu0 0
  %134 = vmatpush1.bf16.msra.mxu0 0
  %135 = vmatprep.mubr.bf16.mxu0 0
  %136 = vmatmul.mubr.bf16.gmra.mrb[0].mxu0 %v101
  %v137 = vpop.f32.mrb[0].mxu0
  %v138 = vadd.f32 %v85, %v137
  %v139 = vpop.f32.mrb[0].mxu0
  %v140 = vpop.f32.mrb[0].mxu0
  %v141 = vadd.f32 %v85, %v140
  %v142 = vpop.f32.mrb[0].mxu0
  %143 = vdwg.mxu0
  %v144 = vmul.f32 %v138, 0.5
  %v145 = vmul.f32 %v141, 0.5
  %v146 = vmul.f32 %v138, 0.70710677
  %v147 = vmul.f32 %v141, 0.70710677
  %vm148 = vcmp.ge.f32.partialorder %v146, 0.0
  %vm149 = vcmp.ge.f32.partialorder %v147, 0.0
  %v150 = vsel %vm148, 1.0, -1.0
  %v151 = vsel %vm149, 1.0, -1.0
  %v152 = vand.u32 2147483647, %v146
  %v153 = vand.u32 2147483647, %v147
  %v154 = vmul.f32 %v152, 0.3275911
  %v155 = vmul.f32 %v153, 0.3275911
  %v156 = vadd.f32 %v154, 1.0
  %v157 = vadd.f32 %v155, 1.0
  %v158 = vrcp.pop %v156
  %v159 = vrcp.pop %v157
  %v160 = vmul.f32 %v156, %v158
  %v161 = vmul.f32 %v157, %v159
  %v162 = vsub.f32 2.0, %v160
  %v163 = vsub.f32 2.0, %v161
  %v164 = vmul.f32 %v158, %v162
  %v165 = vmul.f32 %v159, %v163
  %v166 = vmul.f32 %v164, 1.0614054
  %v167 = vmul.f32 %v165, 1.0614054
  %v168 = vadd.f32 %v166, -1.4531521
  %v169 = vadd.f32 %v167, -1.4531521
  %v170 = vmul.f32 %v168, %v164
  %v171 = vmul.f32 %v169, %v165
  %v172 = vadd.f32 %v170, 1.4214138
  %v173 = vadd.f32 %v171, 1.4214138
  %v174 = vmul.f32 %v172, %v164
  %v175 = vmul.f32 %v173, %v165
  %v176 = vadd.f32 %v174, -0.28449672
  %v177 = vadd.f32 %v175, -0.28449672
  %v178 = vmul.f32 %v176, %v164
  %v179 = vmul.f32 %v177, %v165
  %v180 = vadd.f32 %v178, 0.2548296
  %v181 = vadd.f32 %v179, 0.2548296
  %v182 = vmul.f32 %v180, %v164
  %v183 = vmul.f32 %v181, %v165
  %v184 = vsub.f32 0.0, %v152
  %v185 = vsub.f32 0.0, %v153
  %v186 = vmul.f32 %v184, %v152
  %v187 = vmul.f32 %v185, %v153
  %v188 = vmul.f32 %v186, 1.442695
  %v189 = vpow.pop %v188
  %v190 = vmul.f32 %v187, 1.442695
  %v191 = vpow.pop %v190
  %v192 = vmul.f32 %v182, %v189
  %v193 = vmul.f32 %v183, %v191
  %v194 = vsub.f32 1.0, %v192
  %v195 = vsub.f32 1.0, %v193
  %v196 = vmul.f32 %v150, %v194
  %v197 = vmul.f32 %v151, %v195
  %v198 = vadd.f32 %v196, 1.0
  %v199 = vadd.f32 %v197, 1.0
  %v200 = vmul.f32 %v144, %v198
  %v201 = vmul.f32 %v145, %v199
  %v202 = vpack.c.bf16 %v201, %v200
  %v204 = vunpack.c.l.b16 %v202
  %v205 = vunpack.c.h.b16 %v202
  %v206 = vpack.c.b16 %v204, %v204
  %v207 = vpack.c.b16 %v205, %v205
  %210 = vst [vmem:[%s5] sm:$0xf] %v206
  %211 = vst [vmem:[%s5 + $0x4] sm:$0xf] %v207
  // Predicated region
  $region26: #{_lambda_.12} parent=0 // pred_check
    _
  $region27: #{_lambda_.12} parent=0 // pred_check_branch
    %213 = sbr.rel (0) target = $region29
  $region28: #{_lambda_.12} parent=0 // pred_region
    _
  $region29: #{_lambda_.12} parent=0 // pred_fallthru
    _
  // Predicated region
  $region30: #{_lambda_.12} parent=0 // pred_check
    _
  $region31: #{_lambda_.12} parent=0 // pred_check_branch
    %215 = sbr.rel (0) target = $region33
  $region32: #{_lambda_.12} parent=0 // pred_region
    _
  $region33: #{_lambda_.12} parent=0 // pred_fallthru
    _

</llo_original>
